<compile_context>
chip_gen: v6e
topology: v6e:2x2x1
jax: 0.10.0
libtpu: 0.0.40
codegen_flags: <defaults>
</compile_context>

<pallas_src>
import functools
import math

import jax
import jax.numpy as jnp
from jax import lax
from jax.experimental import pallas as pl
from jax.experimental.pallas import tpu as pltpu

EPS = 1e-5
EXPANSION = 4              # Bottleneck expansion
ACT_DTYPE = jnp.bfloat16   # activation / weight storage dtype (MXU-native)
VMEM_LIMIT = 32 * 1024 * 1024


def _round_up(x, m):
    return (x + m - 1) // m * m


def _pad_k(k):
    """Zero-pad a ragged GEMM K (3x3 im2col) to a 128 multiple when the overhead is <=12.5%."""
    if k % 128 == 0:
        return k
    kp = _round_up(k, 128)
    return kp if kp * 8 <= k * 9 else k


def _pick_k_tile(k):
    """Prefer 256-multiples (full MXU depth on v6e/v7x); otherwise the full K (legal block)."""
    for c in (512, 256, 128):
        if k % c == 0:
            return c
    return k


def _m_tiling(m):
    """Tiling of the flattened N*Ho*Wo axis: (padded_rows, row_tile).  Prefers zero padding."""
    if m <= 512:
        if m % 8 == 0:
            return m, m                      # single tile, no padding
        mp = _round_up(m, 8)
        return mp, mp
    for tm in (512, 256, 128):
        if m % tm == 0:
            return m, tm
    return _round_up(m, 256), 256            # rare ragged case: small zero-row pad


def _pick_row_tile(rows, lanes):
    """Row tile for mem-bound elementwise passes; ~1 MiB (bf16) per block."""
    budget = 512 * 1024                      # elements per block
    if rows * lanes <= budget:
        return rows
    for c in (1024, 512, 256, 128, 64, 32, 16, 8):
        if rows % c == 0 and c * lanes <= budget:
            return c
    return rows


# ------------------------------- Pallas kernels ------------------------------

def _gemm_kernel(*refs, fuse_a):
    """Tiled conv GEMM with f32 accumulation + per-channel sum / sum-of-squares (BN stats).
       With fuse_a, the producer's BN affine + ReLU is applied to the A tile in VMEM right
       before the matmul (consumer-side fusion)."""
    if fuse_a:
        a_ref, w_ref, s_ref, b_ref, y_ref, ps_ref, acc_ref = refs
    else:
        a_ref, w_ref, y_ref, ps_ref, acc_ref = refs
        s_ref = b_ref = None
    k = pl.program_id(2)

    @pl.when(k == 0)
    def _init():
        acc_ref[...] = jnp.zeros_like(acc_ref)

    a = a_ref[...]
    if fuse_a:
        a = jnp.maximum(a.astype(jnp.float32) * s_ref[...] + b_ref[...], 0.0)
        a = a.astype(ACT_DTYPE)
    acc_ref[...] += jnp.dot(a, w_ref[...], preferred_element_type=jnp.float32)

    @pl.when(k == pl.num_programs(2) - 1)
    def _finalize():
        acc = acc_ref[...]
        y_ref[...] = acc.astype(y_ref.dtype)
        # Per-channel partial sums for training-mode BN (zero padding rows contribute nothing).
        ps_ref[0] = jnp.concatenate(
            [jnp.sum(acc, axis=0, keepdims=True),
             jnp.sum(acc * acc, axis=0, keepdims=True)], axis=0)


def _affine_kernel(*refs, relu, has_residual):
    """y*scale + shift (+ residual) (+ ReLU), f32 math, bf16 store."""
    if has_residual:
        y_ref, s_ref, b_ref, r_ref, o_ref = refs
    else:
        y_ref, s_ref, b_ref, o_ref = refs
        r_ref = None
    out = y_ref[...].astype(jnp.float32) * s_ref[...] + b_ref[...]
    if r_ref is not None:
        out = out + r_ref[...].astype(jnp.float32)
    if relu:
        out = jnp.maximum(out, 0.0)
    o_ref[...] = out.astype(o_ref.dtype)


def _pool3_kernel(a_ref, b_ref, c_ref, o_ref):
    o_ref[...] = jnp.maximum(jnp.maximum(a_ref[...], b_ref[...]), c_ref[...])


def _pool3_affine_kernel(a_ref, b_ref, c_ref, s_ref, t_ref, o_ref):
    mx = jnp.maximum(jnp.maximum(a_ref[...], b_ref[...]), c_ref[...]).astype(jnp.float32)
    o_ref[...] = (mx * s_ref[...] + t_ref[...]).astype(o_ref.dtype)


# ------------------------------- GEMM / BN plumbing --------------------------

def _gemm_with_stats(a, w, tm, fuse=None):
    """a: (Mp, K) bf16; w: (K, Cout) bf16.  Optional fuse=(scale, shift): apply
       relu(a*scale+shift) to the A tile in-kernel before the dot.
       Returns y (Mp, Cout) bf16 and per-M-tile BN partial sums (grid_m, 2, Cout) f32."""
    mp, k = a.shape
    cout = w.shape[1]
    kt = _pick_k_tile(k)
    nk = k // kt
    tn = 512 if (cout > 512 and cout % 512 == 0) else cout
    gm, gn = mp // tm, cout // tn
    assert mp % tm == 0 and k % kt == 0 and cout % tn == 0

    inputs = [a, w]
    in_specs = [pl.BlockSpec((tm, kt), lambda m, n, kk: (m, kk)),
                pl.BlockSpec((kt, tn), lambda m, n, kk: (kk, n))]
    if fuse is not None:
        s_in, b_in = fuse
        inputs += [s_in.reshape(1, k).astype(jnp.float32),
                   b_in.reshape(1, k).astype(jnp.float32)]
        in_specs += [pl.BlockSpec((1, kt), lambda m, n, kk: (0, kk)),
                     pl.BlockSpec((1, kt), lambda m, n, kk: (0, kk))]

    y, ps = pl.pallas_call(
        functools.partial(_gemm_kernel, fuse_a=fuse is not None),
        out_shape=(jax.ShapeDtypeStruct((mp, cout), ACT_DTYPE),
                   jax.ShapeDtypeStruct((gm, 2, cout), jnp.float32)),
        grid=(gm, gn, nk),
        in_specs=in_specs,
        out_specs=(pl.BlockSpec((tm, tn), lambda m, n, kk: (m, n)),
                   pl.BlockSpec((1, 2, tn), lambda m, n, kk: (m, 0, n))),
        scratch_shapes=[pltpu.VMEM((tm, tn), jnp.float32)],
        compiler_params=pltpu.CompilerParams(
            dimension_semantics=("parallel", "parallel", "arbitrary"),
            vmem_limit_bytes=VMEM_LIMIT),
    )(*inputs)
    return y, ps


def _bn_scale_shift(ps, m, gamma, beta):
    """Training-mode BatchNorm (biased variance) from the GEMM's per-tile partial sums."""
    total = jnp.sum(ps, axis=0)                  # (2, C) f32
    mean = total[0] / m
    var = jnp.maximum(total[1] / m - mean * mean, 0.0)
    scale = gamma * lax.rsqrt(var + EPS)
    shift = beta - mean * scale
    return scale, shift


def _affine_act(y, scale, shift, residual, relu):
    """Tiled elementwise pass: y*scale+shift (+res) (+ReLU) -> bf16.  Cout<128 is lane-folded
       (two consecutive rows into the 128-lane axis) so stores are lane-dense."""
    mp, cout = y.shape
    fold = 1
    if cout < 128 and 128 % cout == 0 and mp % (128 // cout) == 0:
        fold = 128 // cout
    rows, lanes = mp // fold, cout * fold
    tr = _pick_row_tile(rows, lanes)

    inputs = [y.reshape(rows, lanes),
              jnp.tile(scale, fold).reshape(1, lanes),
              jnp.tile(shift, fold).reshape(1, lanes)]
    in_specs = [pl.BlockSpec((tr, lanes), lambda m: (m, 0)),
                pl.BlockSpec((1, lanes), lambda m: (0, 0)),
                pl.BlockSpec((1, lanes), lambda m: (0, 0))]
    has_res = residual is not None
    if has_res:
        inputs.append(residual.reshape(rows, lanes))
        in_specs.append(pl.BlockSpec((tr, lanes), lambda m: (m, 0)))

    out = pl.pallas_call(
        functools.partial(_affine_kernel, relu=relu, has_residual=has_res),
        out_shape=jax.ShapeDtypeStruct((rows, lanes), ACT_DTYPE),
        grid=(rows // tr,),
        in_specs=in_specs,
        out_specs=pl.BlockSpec((tr, lanes), lambda m: (m, 0)),
        compiler_params=pltpu.CompilerParams(
            dimension_semantics=("parallel",),
            vmem_limit_bytes=VMEM_LIMIT),
    )(*inputs)
    return out.reshape(mp, cout)


def _materialize(y, scale, shift, m, relu, residual=None):
    """Apply the BN affine (+res, +relu) and drop any zero padding rows -> (m, C) bf16."""
    mp = y.shape[0]
    res = residual
    if res is not None and mp > m:
        res = jnp.pad(res, ((0, mp - m), (0, 0)))
    out = _affine_act(y, scale, shift, res, relu)
    return out[:m] if mp > m else out


def _im2col(x, kh, kw, stride, pad, k_pad):
    """x: (N,H,W,C) bf16 -> patches (N*Ho*Wo, k_pad) bf16 (tap-major, Cin-minor, K zero-padded)."""
    n, h, w, c = x.shape
    ho = (h + 2 * pad - kh) // stride + 1
    wo = (w + 2 * pad - kw) // stride + 1
    xp = jnp.pad(x, ((0, 0), (pad, pad), (pad, pad), (0, 0)))
    cols = [xp[:, i:i + stride * ho:stride, j:j + stride * wo:stride, :]
            for i in range(kh) for j in range(kw)]
    k = kh * kw * c
    if k_pad > k:
        cols.append(jnp.zeros((n, ho, wo, k_pad - k), x.dtype))
    patches = jnp.concatenate(cols, axis=-1)
    return patches.reshape(n * ho * wo, k_pad), (n, ho, wo)


def conv_bn(x, conv_p, bn_p, *, stride, pad):
    """Conv2d(bias=False) + training-mode BatchNorm statistics.  Returns the LAZY result:
       (y_pre (mp, Cout) bf16, scale (Cout,) f32, shift (Cout,) f32, (n, ho, wo), m)."""
    kh, kw = conv_p["kh"], conv_p["kw"]
    if kh == 1 and kw == 1:
        xs = x if stride == 1 else x[:, ::stride, ::stride, :]
        n, ho, wo, cin = xs.shape
        a = xs.reshape(n * ho * wo, cin)      # 1x1 convs need no im2col
    else:
        a, (n, ho, wo) = _im2col(x, kh, kw, stride, pad, conv_p["k"])
    m = n * ho * wo
    mp, tm = _m_tiling(m)
    if mp > m:
        a = jnp.pad(a, ((0, mp - m), (0, 0)))  # zero rows: don't perturb BN sums
    y, ps = _gemm_with_stats(a, conv_p["w"], tm)
    scale, shift = _bn_scale_shift(ps, m, bn_p[0], bn_p[1])
    return y, scale, shift, (n, ho, wo), m


def conv1x1_bn_fused(y_in, s_in, b_in, m, conv_p, bn_p):
    """1x1 conv whose input is a lazy BN+ReLU, applied in-kernel on the A tiles.  y_in must
       have exactly m rows (no padding) so this conv's BN sums stay exact."""
    mp, tm = _m_tiling(m)
    assert y_in.shape[0] == m == mp
    y, ps = _gemm_with_stats(y_in, conv_p["w"], tm, fuse=(s_in, b_in))
    scale, shift = _bn_scale_shift(ps, m, bn_p[0], bn_p[1])
    return y, scale, shift


# ------------------------------- stem + maxpool ------------------------------

def _pool3(taps, affine):
    """Elementwise max over 3 equally-shaped (m, C) bf16 taps (+ optional fused BN affine),
       lane-folded to 128 lanes when C < 128."""
    m, c = taps[0].shape
    fold = 1
    if c < 128 and 128 % c == 0 and m % (128 // c) == 0:
        fold = 128 // c
    rows, lanes = m // fold, c * fold
    tr = _pick_row_tile(rows, lanes)

    inputs = [t.reshape(rows, lanes) for t in taps]
    in_specs = [pl.BlockSpec((tr, lanes), lambda i: (i, 0)) for _ in range(3)]
    if affine is None:
        kernel = _pool3_kernel
    else:
        s, b = affine
        inputs += [jnp.tile(s, fold).reshape(1, lanes),
                   jnp.tile(b, fold).reshape(1, lanes)]
        in_specs += [pl.BlockSpec((1, lanes), lambda i: (0, 0)),
                     pl.BlockSpec((1, lanes), lambda i: (0, 0))]
        kernel = _pool3_affine_kernel

    out = pl.pallas_call(
        kernel,
        out_shape=jax.ShapeDtypeStruct((rows, lanes), ACT_DTYPE),
        grid=(rows // tr,),
        in_specs=in_specs,
        out_specs=pl.BlockSpec((tr, lanes), lambda i: (i, 0)),
        compiler_params=pltpu.CompilerParams(
            dimension_semantics=("parallel",),
            vmem_limit_bytes=VMEM_LIMIT),
    )(*inputs)
    return out.reshape(m, c)


def _stem_and_pool(x, params):
    """conv1 (7x7/s2/p3) + bn1 (no ReLU) + MaxPool2d(3, stride=2, padding=1).
       The pool runs on the PRE-affine conv output and the BN affine is fused into the second
       (H) pool pass -- valid because gamma=1 (the module's init) makes the BN scale > 0, so
       the affine commutes with the max.  -inf spatial padding never reaches the output."""
    y, s, b, (n, ho, wo), m = conv_bn(x, params["conv1"], params["bn1"], stride=2, pad=3)
    c = params["conv1"]["w"].shape[1]
    if y.shape[0] > m:
        y = y[:m]
    y4 = y.reshape(n, ho, wo, c)
    po = (ho + 2 - 3) // 2 + 1
    qo = (wo + 2 - 3) // 2 + 1
    xp = jnp.pad(y4, ((0, 0), (1, 1), (1, 1), (0, 0)), constant_values=-jnp.inf)
    # Separable pooling: W-direction max (3 taps, stride 2)...
    taps_w = [xp[:, :, j:j + 2 * qo:2, :].reshape(n * (ho + 2) * qo, c) for j in range(3)]
    t = _pool3(taps_w, affine=None).reshape(n, ho + 2, qo, c)
    # ...then H-direction max (3 taps, stride 2) with the BN affine fused in.
    taps_h = [t[:, i:i + 2 * po:2, :, :].reshape(n * po * qo, c) for i in range(3)]
    out = _pool3(taps_h, affine=(s, b))
    return out.reshape(n, po, qo, c)


# --------------------------- parameter construction --------------------------

class _KeyGen:
    def __init__(self, seed):
        self._key = jax.random.PRNGKey(seed)

    def __call__(self):
        self._key, sub = jax.random.split(self._key)
        return sub


def _conv_param(kg, cin, cout, kh, kw):
    # kaiming_normal_(mode='fan_out', nonlinearity='relu') in PyTorch (Cout,Cin,kh,kw) layout,
    # pre-transformed ONCE into the (kh*kw*Cin, Cout) bf16 GEMM layout (tap-major, Cin-minor,
    # matching the im2col ordering).  Ragged K of spatial convs is zero-padded when cheap.
    fan_out = cout * kh * kw
    std = math.sqrt(2.0 / fan_out)
    w = std * jax.random.normal(kg(), (cout, cin, kh, kw), jnp.float32)
    w_gemm = jnp.transpose(w, (2, 3, 1, 0)).reshape(kh * kw * cin, cout)
    k = kh * kw * cin
    kp = _pad_k(k) if kh * kw > 1 else k
    if kp > k:
        w_gemm = jnp.pad(w_gemm, ((0, kp - k), (0, 0)))
    return {"w": w_gemm.astype(ACT_DTYPE), "kh": kh, "kw": kw, "k": kp}


def _bn_param(c):
    # BatchNorm2d: weight=1, bias=0 (per the module's init loop); kept in f32.
    return jnp.ones((c,), jnp.float32), jnp.zeros((c,), jnp.float32)


def _make_bottleneck(kg, in_ch, width, stride, with_ds):
    p = {"stride": stride,
         "conv1": _conv_param(kg, in_ch, width, 1, 1),
         "conv2": _conv_param(kg, width, width, 3, 3),
         "conv3": _conv_param(kg, width, width * EXPANSION, 1, 1),
         "bn1": _bn_param(width),
         "bn2": _bn_param(width),
         "bn3": _bn_param(width * EXPANSION)}
    if with_ds:
        p["ds"] = _conv_param(kg, in_ch, width * EXPANSION, 1, 1)
        p["bn_ds"] = _bn_param(width * EXPANSION)
    return p


def _make_layer(kg, in_ch, width, num_blocks, stride):
    with_ds = stride != 1 or in_ch != width * EXPANSION
    blocks = [_make_bottleneck(kg, in_ch, width, stride, with_ds)]
    in_ch = width * EXPANSION
    for _ in range(1, num_blocks):
        blocks.append(_make_bottleneck(kg, in_ch, width, 1, False))
    return blocks, in_ch


def init_params(input_channels=3, seed=0):
    kg = _KeyGen(seed)
    params = {"conv1": _conv_param(kg, input_channels, 64, 7, 7),
              "bn1": _bn_param(64)}
    in_ch = 64
    params["res2"], in_ch = _make_layer(kg, in_ch, 64, 3, 1)
    params["res3"], in_ch = _make_layer(kg, in_ch, 128, 4, 2)
    params["res4"], in_ch = _make_layer(kg, in_ch, 256, 6, 2)
    return params


# ----------------------------------- forward ---------------------------------

def _bottleneck_forward(x, p):
    width = p["conv1"]["w"].shape[1]
    cout = p["conv3"]["w"].shape[1]
    stride = p["stride"]

    # conv1 (1x1) + bn1 + ReLU -- materialized (conv2's im2col needs the concrete NHWC tensor).
    y1, s1, b1, shp1, m1 = conv_bn(x, p["conv1"], p["bn1"], stride=1, pad=0)
    x1 = _materialize(y1, s1, b1, m1, relu=True).reshape(shp1 + (width,))

    # conv2 (3x3, stride) + bn2 -- kept lazy; its affine + ReLU is fused into conv3's GEMM.
    y2, s2, b2, shp2, m2 = conv_bn(x1, p["conv2"], p["bn2"], stride=stride, pad=1)
    if y2.shape[0] == m2:
        y3, s3, b3 = conv1x1_bn_fused(y2, s2, b2, m2, p["conv3"], p["bn3"])
    else:   # rare ragged-M fallback: materialize conv2 first so conv3's BN sums stay exact
        x2 = _materialize(y2, s2, b2, m2, relu=True).reshape(shp2 + (width,))
        y3, s3, b3, _, _ = conv_bn(x2, p["conv3"], p["bn3"], stride=1, pad=0)
    m3 = m2

    # identity path
    if "ds" in p:
        yd, sd, bd, _, md = conv_bn(x, p["ds"], p["bn_ds"], stride=stride, pad=0)
        identity = _materialize(yd, sd, bd, md, relu=False)            # (m3, cout)
    else:
        identity = x.reshape(m3, cout)

    # conv3 + bn3 + residual add + ReLU in one fused elementwise pass.
    out = _materialize(y3, s3, b3, m3, relu=True, residual=identity)
    n, ho, wo = shp2
    return out.reshape(n, ho, wo, cout)


def resnet_feature_extractor(x_nchw, params):
    x = jnp.transpose(x_nchw, (0, 2, 3, 1)).astype(ACT_DTYPE)   # NCHW -> NHWC, bf16
    x = _stem_and_pool(x, params)
    for stage in ("res2", "res3", "res4"):
        for p in params[stage]:
            x = _bottleneck_forward(x, p)
    return jnp.transpose(x, (0, 3, 1, 2)).astype(jnp.float32)   # NHWC -> NCHW, f32


if __name__ == "__main__":
    key = jax.random.PRNGKey(0)
    x = jax.random.normal(key, (2, 3, 32, 32), jnp.float32)     # NCHW, input_channels=3
    params = init_params(input_channels=3, seed=0)
    out = resnet_feature_extractor(x, params)
    out = jax.block_until_ready(out)
    # 32 -> conv1/2 -> 16 -> maxpool/2 -> 8 -> res3/2 -> 4 -> res4/2 -> 2 ; C = 256*4
    assert out.shape == (2, 1024, 2, 2), out.shape
    assert bool(jnp.all(jnp.isfinite(out)))
    print("KERNEL_OK")
</pallas_src>

<mosaic_0001>
module attributes {stable_mosaic.version = 11 : i64} {
  func.func @_gemm_kernel(%arg0: i32, %arg1: i32, %arg2: i32, %arg3: memref<512x147xbf16, #tpu.memory_space<vmem>>, %arg4: memref<147x64xbf16, #tpu.memory_space<vmem>>, %arg5: memref<512x64xbf16, #tpu.memory_space<vmem>>, %arg6: memref<1x2x64xf32, #tpu.memory_space<vmem>>, %arg7: memref<512x64xf32, #tpu.memory_space<vmem>>) attributes {dimension_semantics = [#tpu.dimension_semantics<parallel>, #tpu.dimension_semantics<parallel>, #tpu.dimension_semantics<arbitrary>], iteration_bounds = array<i64: 1, 1, 1>, scalar_prefetch = 0 : i64, scratch_operands = 1 : i64, tpu.core_type = #tpu.core_type<tc>, window_params = [{transform_indices = @transform_0, window_bounds = array<i64: 512, 147>}, {transform_indices = @transform_1, window_bounds = array<i64: 147, 64>}, {transform_indices = @transform_2, window_bounds = array<i64: 512, 64>}, {transform_indices = @transform_3, window_bounds = array<i64: 1, 2, 64>}]} {
    %c0_i32 = arith.constant 0 : i32
    %0 = arith.cmpi eq, %arg2, %c0_i32 : i32
    %1 = arith.extui %0 : i1 to i32
    %c0_i32_0 = arith.constant 0 : i32
    %2 = arith.cmpi ne, %1, %c0_i32_0 : i32
    scf.if %2 {
      %cst_10 = arith.constant 0.000000e+00 : f32
      %12 = vector.broadcast %cst_10 : f32 to vector<512x64xf32>
      %c0_11 = arith.constant 0 : index
      %c0_12 = arith.constant 0 : index
      %13 = vector.load %arg7[%c0_11, %c0_12] : memref<512x64xf32, #tpu.memory_space<vmem>>, vector<512x64xf32>
      tpu.vector_store %arg7[%c0_11, %c0_12], %12 {strides = array<i32>} : memref<512x64xf32, #tpu.memory_space<vmem>>, vector<512x64xf32>,
    } else {
    }
    %c0 = arith.constant 0 : index
    %c0_1 = arith.constant 0 : index
    %3 = vector.load %arg3[%c0, %c0_1] : memref<512x147xbf16, #tpu.memory_space<vmem>>, vector<512x147xbf16>
    %c0_2 = arith.constant 0 : index
    %c0_3 = arith.constant 0 : index
    %4 = vector.load %arg7[%c0_2, %c0_3] : memref<512x64xf32, #tpu.memory_space<vmem>>, vector<512x64xf32>
    %c0_4 = arith.constant 0 : index
    %c0_5 = arith.constant 0 : index
    %5 = vector.load %arg4[%c0_4, %c0_5] : memref<147x64xbf16, #tpu.memory_space<vmem>>, vector<147x64xbf16>
    %cst = arith.constant dense<0.000000e+00> : vector<512x64xf32>
    %6 = tpu.matmul %3, %5, %cst {dimension_numbers = #tpu.dot_dimension_numbers<[1], [0], [0], [1], [0, 0, 1, 1], [], []>} : vector<512x147xbf16>, vector<147x64xbf16>, vector<512x64xf32> -> vector<512x64xf32>
    %7 = arith.addf %4, %6 : vector<512x64xf32>
    %c0_6 = arith.constant 0 : index
    %c0_7 = arith.constant 0 : index
    %8 = vector.load %arg7[%c0_6, %c0_7] : memref<512x64xf32, #tpu.memory_space<vmem>>, vector<512x64xf32>
    tpu.vector_store %arg7[%c0_6, %c0_7], %7 {strides = array<i32>} : memref<512x64xf32, #tpu.memory_space<vmem>>, vector<512x64xf32>,
    %c0_i32_8 = arith.constant 0 : i32
    %9 = arith.cmpi eq, %arg2, %c0_i32_8 : i32
    %10 = arith.extui %9 : i1 to i32
    %c0_i32_9 = arith.constant 0 : i32
    %11 = arith.cmpi ne, %10, %c0_i32_9 : i32
    scf.if %11 {
      %c0_10 = arith.constant 0 : index
      %c0_11 = arith.constant 0 : index
      %12 = vector.load %arg7[%c0_10, %c0_11] : memref<512x64xf32, #tpu.memory_space<vmem>>, vector<512x64xf32>
      %13 = arith.truncf %12 : vector<512x64xf32> to vector<512x64xbf16>
      %c0_12 = arith.constant 0 : index
      %c0_13 = arith.constant 0 : index
      %14 = vector.load %arg5[%c0_12, %c0_13] : memref<512x64xbf16, #tpu.memory_space<vmem>>, vector<512x64xbf16>
      tpu.vector_store %arg5[%c0_12, %c0_13], %13 {strides = array<i32>} : memref<512x64xbf16, #tpu.memory_space<vmem>>, vector<512x64xbf16>,
      %cst_14 = arith.constant dense<0.000000e+00> : vector<64xf32>
      %15 = vector.multi_reduction <add>, %12, %cst_14 [0] : vector<512x64xf32> to vector<64xf32>
      %16 = vector.shape_cast %15 : vector<64xf32> to vector<1x64xf32>
      %17 = arith.mulf %12, %12 : vector<512x64xf32>
      %cst_15 = arith.constant dense<0.000000e+00> : vector<64xf32>
      %18 = vector.multi_reduction <add>, %17, %cst_15 [0] : vector<512x64xf32> to vector<64xf32>
      %19 = vector.shape_cast %18 : vector<64xf32> to vector<1x64xf32>
      %20 = tpu.concatenate %16, %19 in 0 : vector<1x64xf32>, vector<1x64xf32> -> vector<2x64xf32>
      %c0_16 = arith.constant 0 : index
      %c0_17 = arith.constant 0 : index
      %c0_18 = arith.constant 0 : index
      %21 = vector.load %arg6[%c0_16, %c0_17, %c0_18] : memref<1x2x64xf32, #tpu.memory_space<vmem>>, vector<1x2x64xf32>
      %22 = vector.shape_cast %21 : vector<1x2x64xf32> to vector<2x64xf32>
      %23 = vector.shape_cast %20 : vector<2x64xf32> to vector<1x2x64xf32>
      tpu.vector_store %arg6[%c0_16, %c0_17, %c0_18], %23 {strides = array<i32>} : memref<1x2x64xf32, #tpu.memory_space<vmem>>, vector<1x2x64xf32>,
    } else {
    }
    return
  }
  func.func @transform_0(%arg0: i32, %arg1: i32, %arg2: i32) -> (i32, i32) {
    %c0_i32 = arith.constant 0 : i32
    return %arg0, %arg2 : i32, i32
  }
  func.func @transform_1(%arg0: i32, %arg1: i32, %arg2: i32) -> (i32, i32) {
    %c0_i32 = arith.constant 0 : i32
    return %arg2, %arg1 : i32, i32
  }
  func.func @transform_2(%arg0: i32, %arg1: i32, %arg2: i32) -> (i32, i32) {
    %c0_i32 = arith.constant 0 : i32
    return %arg0, %arg1 : i32, i32
  }
  func.func @transform_3(%arg0: i32, %arg1: i32, %arg2: i32) -> (i32, i32, i32) {
    %c0_i32 = arith.constant 0 : i32
    %c0_i32_0 = arith.constant 0 : i32
    return %arg0, %c0_i32, %arg1 : i32, i32, i32
  }
}

</mosaic_0001>

<llo_original>
// kernel: tpu_custom_call.1
$region0: #{tpu_custom_call.1}
  #allocation0 [shape = 'u32[]', space=smem, size = 0x4, offset = 0x4, fixed_abs, tag = 'smem constant byte address 0x4 - core index']
  #allocation1 [shape = 'u32[144,128]{1,0:T(1,128)}', space=vmem, size = 0x12000, scoped, tag = 'internal scratch']
  #allocation2 [shape = 'f32[512,64]{1,0:T(8,128)}', space=vmem, size = 0x40000, scoped, tag = 'scratch operand']
  %s0 = inlined_call_operand.vmem [shape: bf16[512,147], index: 0, kind: input, shape index: {}]
  %s1 = inlined_call_operand.vmem [shape: bf16[147,64], index: 1, kind: input, shape index: {}]
  %s2 = inlined_call_operand.vmem [shape: bf16[512,64], index: 2, kind: output, shape index: {0}]
  %s3 = inlined_call_operand.hbm [shape: f32[1,2,64], index: 3, kind: output, shape index: {1}]
  %4 = xla_tuple %s2, %s3
  %s5 = sld [smem:[#allocation0]]
  $region34: #{tpu_custom_call.1} parent=0
    _
  %s7 = ssub.s32 1, %s5
  %s8 = scalar_select 0, %s7, %s5
  $region1: #{tpu_custom_call.1} parent=0
    #allocation3 [shape = 'u8[1024]{0}', space=vmem, size = 0x400, scoped, tag = 'output window, operand 1, single buffered']
    #allocation4 [shape = 's32[1]{0}', space=sflag, size = 0x4, scoped, tag = 'scoped memory for tpu_custom_call.1']
    %9 = vsyncpa [#allocation4], 0
    // Predicated region
    $region2: #{tpu_custom_call.1} parent=1 // pred_check
      _
    $region3: #{tpu_custom_call.1} parent=1 // pred_check_branch
      %11 = sbr.rel (0) target = $region5
    $region4: #{tpu_custom_call.1} parent=1 // pred_region
      _
    $region5: #{tpu_custom_call.1} parent=1 // pred_fallthru
      _
    // Predicated region
    $region6: #{tpu_custom_call.1} parent=1 // pred_check
      _
    $region7: #{tpu_custom_call.1} parent=1 // pred_check_branch
      %13 = sbr.rel (0) target = $region9
    $region8: #{tpu_custom_call.1} parent=1 // pred_region
      _
    $region9: #{tpu_custom_call.1} parent=1 // pred_fallthru
      _
    %p15 = scmp.eq.s32.totalorder 0, 0
    // Predicated region
    $region10: #{tpu_custom_call.1} parent=1 // pred_check
      %p16 = pneg %p15
    $region11: #{tpu_custom_call.1} parent=1 // pred_check_branch
      %18 = sbr.rel (%p16) target = $region13
    $region12: #{tpu_custom_call.1} parent=1 // pred_region
      %vm19 = vcmask 523264
      %20 = vst.msk [vmem:[#allocation2] sm:$0xff] %vm19, 0.0
      %21 = vst.msk [vmem:[#allocation2 + $0x8] sm:$0xff] %vm19, 0.0
      %22 = vst.msk [vmem:[#allocation2 + $0x10] sm:$0xff] %vm19, 0.0
      %23 = vst.msk [vmem:[#allocation2 + $0x18] sm:$0xff] %vm19, 0.0
      %24 = vst.msk [vmem:[#allocation2 + $0x20] sm:$0xff] %vm19, 0.0
      %25 = vst.msk [vmem:[#allocation2 + $0x28] sm:$0xff] %vm19, 0.0
      %26 = vst.msk [vmem:[#allocation2 + $0x30] sm:$0xff] %vm19, 0.0
      %27 = vst.msk [vmem:[#allocation2 + $0x38] sm:$0xff] %vm19, 0.0
      %28 = vst.msk [vmem:[#allocation2 + $0x40] sm:$0xff] %vm19, 0.0
      %29 = vst.msk [vmem:[#allocation2 + $0x48] sm:$0xff] %vm19, 0.0
      %30 = vst.msk [vmem:[#allocation2 + $0x50] sm:$0xff] %vm19, 0.0
      %31 = vst.msk [vmem:[#allocation2 + $0x58] sm:$0xff] %vm19, 0.0
      %32 = vst.msk [vmem:[#allocation2 + $0x60] sm:$0xff] %vm19, 0.0
      %33 = vst.msk [vmem:[#allocation2 + $0x68] sm:$0xff] %vm19, 0.0
      %34 = vst.msk [vmem:[#allocation2 + $0x70] sm:$0xff] %vm19, 0.0
      %35 = vst.msk [vmem:[#allocation2 + $0x78] sm:$0xff] %vm19, 0.0
      %36 = vst.msk [vmem:[#allocation2 + $0x80] sm:$0xff] %vm19, 0.0
      %37 = vst.msk [vmem:[#allocation2 + $0x88] sm:$0xff] %vm19, 0.0
      %38 = vst.msk [vmem:[#allocation2 + $0x90] sm:$0xff] %vm19, 0.0
      %39 = vst.msk [vmem:[#allocation2 + $0x98] sm:$0xff] %vm19, 0.0
      %40 = vst.msk [vmem:[#allocation2 + $0xa0] sm:$0xff] %vm19, 0.0
      %41 = vst.msk [vmem:[#allocation2 + $0xa8] sm:$0xff] %vm19, 0.0
      %42 = vst.msk [vmem:[#allocation2 + $0xb0] sm:$0xff] %vm19, 0.0
      %43 = vst.msk [vmem:[#allocation2 + $0xb8] sm:$0xff] %vm19, 0.0
      %44 = vst.msk [vmem:[#allocation2 + $0xc0] sm:$0xff] %vm19, 0.0
      %45 = vst.msk [vmem:[#allocation2 + $0xc8] sm:$0xff] %vm19, 0.0
      %46 = vst.msk [vmem:[#allocation2 + $0xd0] sm:$0xff] %vm19, 0.0
      %47 = vst.msk [vmem:[#allocation2 + $0xd8] sm:$0xff] %vm19, 0.0
      %48 = vst.msk [vmem:[#allocation2 + $0xe0] sm:$0xff] %vm19, 0.0
      %49 = vst.msk [vmem:[#allocation2 + $0xe8] sm:$0xff] %vm19, 0.0
      %50 = vst.msk [vmem:[#allocation2 + $0xf0] sm:$0xff] %vm19, 0.0
      %51 = vst.msk [vmem:[#allocation2 + $0xf8] sm:$0xff] %vm19, 0.0
      %52 = vst.msk [vmem:[#allocation2 + $0x100] sm:$0xff] %vm19, 0.0
      %53 = vst.msk [vmem:[#allocation2 + $0x108] sm:$0xff] %vm19, 0.0
      %54 = vst.msk [vmem:[#allocation2 + $0x110] sm:$0xff] %vm19, 0.0
      %55 = vst.msk [vmem:[#allocation2 + $0x118] sm:$0xff] %vm19, 0.0
      %56 = vst.msk [vmem:[#allocation2 + $0x120] sm:$0xff] %vm19, 0.0
      %57 = vst.msk [vmem:[#allocation2 + $0x128] sm:$0xff] %vm19, 0.0
      %58 = vst.msk [vmem:[#allocation2 + $0x130] sm:$0xff] %vm19, 0.0
      %59 = vst.msk [vmem:[#allocation2 + $0x138] sm:$0xff] %vm19, 0.0
      %60 = vst.msk [vmem:[#allocation2 + $0x140] sm:$0xff] %vm19, 0.0
      %61 = vst.msk [vmem:[#allocation2 + $0x148] sm:$0xff] %vm19, 0.0
      %62 = vst.msk [vmem:[#allocation2 + $0x150] sm:$0xff] %vm19, 0.0
      %63 = vst.msk [vmem:[#allocation2 + $0x158] sm:$0xff] %vm19, 0.0
      %64 = vst.msk [vmem:[#allocation2 + $0x160] sm:$0xff] %vm19, 0.0
      %65 = vst.msk [vmem:[#allocation2 + $0x168] sm:$0xff] %vm19, 0.0
      %66 = vst.msk [vmem:[#allocation2 + $0x170] sm:$0xff] %vm19, 0.0
      %67 = vst.msk [vmem:[#allocation2 + $0x178] sm:$0xff] %vm19, 0.0
      %68 = vst.msk [vmem:[#allocation2 + $0x180] sm:$0xff] %vm19, 0.0
      %69 = vst.msk [vmem:[#allocation2 + $0x188] sm:$0xff] %vm19, 0.0
      %70 = vst.msk [vmem:[#allocation2 + $0x190] sm:$0xff] %vm19, 0.0
      %71 = vst.msk [vmem:[#allocation2 + $0x198] sm:$0xff] %vm19, 0.0
      %72 = vst.msk [vmem:[#allocation2 + $0x1a0] sm:$0xff] %vm19, 0.0
      %73 = vst.msk [vmem:[#allocation2 + $0x1a8] sm:$0xff] %vm19, 0.0
      %74 = vst.msk [vmem:[#allocation2 + $0x1b0] sm:$0xff] %vm19, 0.0
      %75 = vst.msk [vmem:[#allocation2 + $0x1b8] sm:$0xff] %vm19, 0.0
      %76 = vst.msk [vmem:[#allocation2 + $0x1c0] sm:$0xff] %vm19, 0.0
      %77 = vst.msk [vmem:[#allocation2 + $0x1c8] sm:$0xff] %vm19, 0.0
      %78 = vst.msk [vmem:[#allocation2 + $0x1d0] sm:$0xff] %vm19, 0.0
      %79 = vst.msk [vmem:[#allocation2 + $0x1d8] sm:$0xff] %vm19, 0.0
      %80 = vst.msk [vmem:[#allocation2 + $0x1e0] sm:$0xff] %vm19, 0.0
      %81 = vst.msk [vmem:[#allocation2 + $0x1e8] sm:$0xff] %vm19, 0.0
      %82 = vst.msk [vmem:[#allocation2 + $0x1f0] sm:$0xff] %vm19, 0.0
      %83 = vst.msk [vmem:[#allocation2 + $0x1f8] sm:$0xff] %vm19, 0.0
    $region13: #{tpu_custom_call.1} parent=1 // pred_fallthru
      _
    %v84 = vld [vmem:[%s0] sm:$0xff]
    %v85 = vld [vmem:[%s0 + $0x8] sm:$0xff]
    %v86 = vld [vmem:[%s0 + $0x10] sm:$0xff]
    %v87 = vld [vmem:[%s0 + $0x18] sm:$0xff]
    %v88 = vld [vmem:[%s0 + $0x20] sm:$0xff]
    %v89 = vld [vmem:[%s0 + $0x28] sm:$0xff]
    %v90 = vld [vmem:[%s0 + $0x30] sm:$0xff]
    %v91 = vld [vmem:[%s0 + $0x38] sm:$0xff]
    %v92 = vld [vmem:[%s0 + $0x40] sm:$0xff]
    %v93 = vld [vmem:[%s0 + $0x48] sm:$0xff]
    %v94 = vld [vmem:[%s0 + $0x50] sm:$0xff]
    %v95 = vld [vmem:[%s0 + $0x58] sm:$0xff]
    %v96 = vld [vmem:[%s0 + $0x60] sm:$0xff]
    %v97 = vld [vmem:[%s0 + $0x68] sm:$0xff]
    %v98 = vld [vmem:[%s0 + $0x70] sm:$0xff]
    %v99 = vld [vmem:[%s0 + $0x78] sm:$0xff]
    %v100 = vld [vmem:[%s0 + $0x80] sm:$0xff]
    %v101 = vld [vmem:[%s0 + $0x88] sm:$0xff]
    %v102 = vld [vmem:[%s0 + $0x90] sm:$0xff]
    %v103 = vld [vmem:[%s0 + $0x98] sm:$0xff]
    %v104 = vld [vmem:[%s0 + $0xa0] sm:$0xff]
    %v105 = vld [vmem:[%s0 + $0xa8] sm:$0xff]
    %v106 = vld [vmem:[%s0 + $0xb0] sm:$0xff]
    %v107 = vld [vmem:[%s0 + $0xb8] sm:$0xff]
    %v108 = vld [vmem:[%s0 + $0xc0] sm:$0xff]
    %v109 = vld [vmem:[%s0 + $0xc8] sm:$0xff]
    %v110 = vld [vmem:[%s0 + $0xd0] sm:$0xff]
    %v111 = vld [vmem:[%s0 + $0xd8] sm:$0xff]
    %v112 = vld [vmem:[%s0 + $0xe0] sm:$0xff]
    %v113 = vld [vmem:[%s0 + $0xe8] sm:$0xff]
    %v114 = vld [vmem:[%s0 + $0xf0] sm:$0xff]
    %v115 = vld [vmem:[%s0 + $0xf8] sm:$0xff]
    %v116 = vld [vmem:[%s0 + $0x100] sm:$0xff]
    %v117 = vld [vmem:[%s0 + $0x108] sm:$0xff]
    %v118 = vld [vmem:[%s0 + $0x110] sm:$0xff]
    %v119 = vld [vmem:[%s0 + $0x118] sm:$0xff]
    %v120 = vld [vmem:[%s0 + $0x120] sm:$0xff]
    %v121 = vld [vmem:[%s0 + $0x128] sm:$0xff]
    %v122 = vld [vmem:[%s0 + $0x130] sm:$0xff]
    %v123 = vld [vmem:[%s0 + $0x138] sm:$0xff]
    %v124 = vld [vmem:[%s0 + $0x140] sm:$0xff]
    %v125 = vld [vmem:[%s0 + $0x148] sm:$0xff]
    %v126 = vld [vmem:[%s0 + $0x150] sm:$0xff]
    %v127 = vld [vmem:[%s0 + $0x158] sm:$0xff]
    %v128 = vld [vmem:[%s0 + $0x160] sm:$0xff]
    %v129 = vld [vmem:[%s0 + $0x168] sm:$0xff]
    %v130 = vld [vmem:[%s0 + $0x170] sm:$0xff]
    %v131 = vld [vmem:[%s0 + $0x178] sm:$0xff]
    %v132 = vld [vmem:[%s0 + $0x180] sm:$0xff]
    %v133 = vld [vmem:[%s0 + $0x188] sm:$0xff]
    %v134 = vld [vmem:[%s0 + $0x190] sm:$0xff]
    %v135 = vld [vmem:[%s0 + $0x198] sm:$0xff]
    %v136 = vld [vmem:[%s0 + $0x1a0] sm:$0xff]
    %v137 = vld [vmem:[%s0 + $0x1a8] sm:$0xff]
    %v138 = vld [vmem:[%s0 + $0x1b0] sm:$0xff]
    %v139 = vld [vmem:[%s0 + $0x1b8] sm:$0xff]
    %v140 = vld [vmem:[%s0 + $0x1c0] sm:$0xff]
    %v141 = vld [vmem:[%s0 + $0x1c8] sm:$0xff]
    %v142 = vld [vmem:[%s0 + $0x1d0] sm:$0xff]
    %v143 = vld [vmem:[%s0 + $0x1d8] sm:$0xff]
    %v144 = vld [vmem:[%s0 + $0x1e0] sm:$0xff]
    %v145 = vld [vmem:[%s0 + $0x1e8] sm:$0xff]
    %v146 = vld [vmem:[%s0 + $0x1f0] sm:$0xff]
    %v147 = vld [vmem:[%s0 + $0x1f8] sm:$0xff]
    %v148 = vld [vmem:[#allocation2] sm:$0xff]
    %v149 = vld [vmem:[#allocation2 + $0x8] sm:$0xff]
    %v150 = vld [vmem:[#allocation2 + $0x10] sm:$0xff]
    %v151 = vld [vmem:[#allocation2 + $0x18] sm:$0xff]
    %v152 = vld [vmem:[#allocation2 + $0x20] sm:$0xff]
    %v153 = vld [vmem:[#allocation2 + $0x28] sm:$0xff]
    %v154 = vld [vmem:[#allocation2 + $0x30] sm:$0xff]
    %v155 = vld [vmem:[#allocation2 + $0x38] sm:$0xff]
    %v156 = vld [vmem:[#allocation2 + $0x40] sm:$0xff]
    %v157 = vld [vmem:[#allocation2 + $0x48] sm:$0xff]
    %v158 = vld [vmem:[#allocation2 + $0x50] sm:$0xff]
    %v159 = vld [vmem:[#allocation2 + $0x58] sm:$0xff]
    %v160 = vld [vmem:[#allocation2 + $0x60] sm:$0xff]
    %v161 = vld [vmem:[#allocation2 + $0x68] sm:$0xff]
    %v162 = vld [vmem:[#allocation2 + $0x70] sm:$0xff]
    %v163 = vld [vmem:[#allocation2 + $0x78] sm:$0xff]
    %v164 = vld [vmem:[#allocation2 + $0x80] sm:$0xff]
    %v165 = vld [vmem:[#allocation2 + $0x88] sm:$0xff]
    %v166 = vld [vmem:[#allocation2 + $0x90] sm:$0xff]
    %v167 = vld [vmem:[#allocation2 + $0x98] sm:$0xff]
    %v168 = vld [vmem:[#allocation2 + $0xa0] sm:$0xff]
    %v169 = vld [vmem:[#allocation2 + $0xa8] sm:$0xff]
    %v170 = vld [vmem:[#allocation2 + $0xb0] sm:$0xff]
    %v171 = vld [vmem:[#allocation2 + $0xb8] sm:$0xff]
    %v172 = vld [vmem:[#allocation2 + $0xc0] sm:$0xff]
    %v173 = vld [vmem:[#allocation2 + $0xc8] sm:$0xff]
    %v174 = vld [vmem:[#allocation2 + $0xd0] sm:$0xff]
    %v175 = vld [vmem:[#allocation2 + $0xd8] sm:$0xff]
    %v176 = vld [vmem:[#allocation2 + $0xe0] sm:$0xff]
    %v177 = vld [vmem:[#allocation2 + $0xe8] sm:$0xff]
    %v178 = vld [vmem:[#allocation2 + $0xf0] sm:$0xff]
    %v179 = vld [vmem:[#allocation2 + $0xf8] sm:$0xff]
    %v180 = vld [vmem:[#allocation2 + $0x100] sm:$0xff]
    %v181 = vld [vmem:[#allocation2 + $0x108] sm:$0xff]
    %v182 = vld [vmem:[#allocation2 + $0x110] sm:$0xff]
    %v183 = vld [vmem:[#allocation2 + $0x118] sm:$0xff]
    %v184 = vld [vmem:[#allocation2 + $0x120] sm:$0xff]
    %v185 = vld [vmem:[#allocation2 + $0x128] sm:$0xff]
    %v186 = vld [vmem:[#allocation2 + $0x130] sm:$0xff]
    %v187 = vld [vmem:[#allocation2 + $0x138] sm:$0xff]
    %v188 = vld [vmem:[#allocation2 + $0x140] sm:$0xff]
    %v189 = vld [vmem:[#allocation2 + $0x148] sm:$0xff]
    %v190 = vld [vmem:[#allocation2 + $0x150] sm:$0xff]
    %v191 = vld [vmem:[#allocation2 + $0x158] sm:$0xff]
    %v192 = vld [vmem:[#allocation2 + $0x160] sm:$0xff]
    %v193 = vld [vmem:[#allocation2 + $0x168] sm:$0xff]
    %v194 = vld [vmem:[#allocation2 + $0x170] sm:$0xff]
    %v195 = vld [vmem:[#allocation2 + $0x178] sm:$0xff]
    %v196 = vld [vmem:[#allocation2 + $0x180] sm:$0xff]
    %v197 = vld [vmem:[#allocation2 + $0x188] sm:$0xff]
    %v198 = vld [vmem:[#allocation2 + $0x190] sm:$0xff]
    %v199 = vld [vmem:[#allocation2 + $0x198] sm:$0xff]
    %v200 = vld [vmem:[#allocation2 + $0x1a0] sm:$0xff]
    %v201 = vld [vmem:[#allocation2 + $0x1a8] sm:$0xff]
    %v202 = vld [vmem:[#allocation2 + $0x1b0] sm:$0xff]
    %v203 = vld [vmem:[#allocation2 + $0x1b8] sm:$0xff]
    %v204 = vld [vmem:[#allocation2 + $0x1c0] sm:$0xff]
    %v205 = vld [vmem:[#allocation2 + $0x1c8] sm:$0xff]
    %v206 = vld [vmem:[#allocation2 + $0x1d0] sm:$0xff]
    %v207 = vld [vmem:[#allocation2 + $0x1d8] sm:$0xff]
    %v208 = vld [vmem:[#allocation2 + $0x1e0] sm:$0xff]
    %v209 = vld [vmem:[#allocation2 + $0x1e8] sm:$0xff]
    %v210 = vld [vmem:[#allocation2 + $0x1f0] sm:$0xff]
    %v211 = vld [vmem:[#allocation2 + $0x1f8] sm:$0xff]
    %v212 = vld [vmem:[%s1] sm:$0xf]
    %v213 = vld [vmem:[%s1 + $0x4] sm:$0xf]
    %v214 = vld [vmem:[%s1 + $0x8] sm:$0xf]
    %v215 = vld [vmem:[%s1 + $0xc] sm:$0xf]
    %v216 = vld [vmem:[%s1 + $0x10] sm:$0xf]
    %v217 = vld [vmem:[%s1 + $0x14] sm:$0xf]
    %v218 = vld [vmem:[%s1 + $0x18] sm:$0xf]
    %v219 = vld [vmem:[%s1 + $0x1c] sm:$0xf]
    %v220 = vld [vmem:[%s1 + $0x20] sm:$0xf]
    %v221 = vld [vmem:[%s1 + $0x24] sm:$0xf]
    %v222 = vld [vmem:[%s1 + $0x28] sm:$0xf]
    %v223 = vld [vmem:[%s1 + $0x2c] sm:$0xf]
    %v224 = vld [vmem:[%s1 + $0x30] sm:$0xf]
    %v225 = vld [vmem:[%s1 + $0x34] sm:$0xf]
    %v226 = vld [vmem:[%s1 + $0x38] sm:$0xf]
    %v227 = vld [vmem:[%s1 + $0x3c] sm:$0xf]
    %v228 = vld [vmem:[%s1 + $0x40] sm:$0xf]
    %v229 = vld [vmem:[%s1 + $0x44] sm:$0xf]
    %v230 = vld [vmem:[%s1 + $0x48] sm:$0x3]
    %v295 = vunpack.c.l.b16 %v84
    %v296 = vunpack.c.h.b16 %v84
    %v297 = vunpack.c.l.b16 %v85
    %v298 = vunpack.c.h.b16 %v85
    %v299 = vunpack.c.l.b16 %v86
    %v300 = vunpack.c.h.b16 %v86
    %v301 = vunpack.c.l.b16 %v87
    %v302 = vunpack.c.h.b16 %v87
    %v303 = vunpack.c.l.b16 %v88
    %v304 = vunpack.c.h.b16 %v88
    %v305 = vunpack.c.l.b16 %v89
    %v306 = vunpack.c.h.b16 %v89
    %v307 = vunpack.c.l.b16 %v90
    %v308 = vunpack.c.h.b16 %v90
    %v309 = vunpack.c.l.b16 %v91
    %v310 = vunpack.c.h.b16 %v91
    %v311 = vunpack.c.l.b16 %v92
    %v312 = vunpack.c.h.b16 %v92
    %v313 = vunpack.c.l.b16 %v93
    %v314 = vunpack.c.h.b16 %v93
    %v315 = vunpack.c.l.b16 %v94
    %v316 = vunpack.c.h.b16 %v94
    %v317 = vunpack.c.l.b16 %v95
    %v318 = vunpack.c.h.b16 %v95
    %v319 = vunpack.c.l.b16 %v96
    %v320 = vunpack.c.h.b16 %v96
    %v321 = vunpack.c.l.b16 %v97
    %v322 = vunpack.c.h.b16 %v97
    %v323 = vunpack.c.l.b16 %v98
    %v324 = vunpack.c.h.b16 %v98
    %v325 = vunpack.c.l.b16 %v99
    %v326 = vunpack.c.h.b16 %v99
    %v327 = vunpack.c.l.b16 %v100
    %v328 = vunpack.c.h.b16 %v100
    %v329 = vunpack.c.l.b16 %v101
    %v330 = vunpack.c.h.b16 %v101
    %v331 = vunpack.c.l.b16 %v102
    %v332 = vunpack.c.h.b16 %v102
    %v333 = vunpack.c.l.b16 %v103
    %v334 = vunpack.c.h.b16 %v103
    %v335 = vunpack.c.l.b16 %v104
    %v336 = vunpack.c.h.b16 %v104
    %v337 = vunpack.c.l.b16 %v105
    %v338 = vunpack.c.h.b16 %v105
    %v339 = vunpack.c.l.b16 %v106
    %v340 = vunpack.c.h.b16 %v106
    %v341 = vunpack.c.l.b16 %v107
    %v342 = vunpack.c.h.b16 %v107
    %v343 = vunpack.c.l.b16 %v108
    %v344 = vunpack.c.h.b16 %v108
    %v345 = vunpack.c.l.b16 %v109
    %v346 = vunpack.c.h.b16 %v109
    %v347 = vunpack.c.l.b16 %v110
    %v348 = vunpack.c.h.b16 %v110
    %v349 = vunpack.c.l.b16 %v111
    %v350 = vunpack.c.h.b16 %v111
    %v351 = vunpack.c.l.b16 %v112
    %v352 = vunpack.c.h.b16 %v112
    %v353 = vunpack.c.l.b16 %v113
    %v354 = vunpack.c.h.b16 %v113
    %v355 = vunpack.c.l.b16 %v114
    %v356 = vunpack.c.h.b16 %v114
    %v357 = vunpack.c.l.b16 %v115
    %v358 = vunpack.c.h.b16 %v115
    %v359 = vunpack.c.l.b16 %v116
    %v360 = vunpack.c.h.b16 %v116
    %v361 = vunpack.c.l.b16 %v117
    %v362 = vunpack.c.h.b16 %v117
    %v363 = vunpack.c.l.b16 %v118
    %v364 = vunpack.c.h.b16 %v118
    %v365 = vunpack.c.l.b16 %v119
    %v366 = vunpack.c.h.b16 %v119
    %v367 = vunpack.c.l.b16 %v120
    %v368 = vunpack.c.h.b16 %v120
    %v369 = vunpack.c.l.b16 %v121
    %v370 = vunpack.c.h.b16 %v121
    %v371 = vunpack.c.l.b16 %v122
    %v372 = vunpack.c.h.b16 %v122
    %v373 = vunpack.c.l.b16 %v123
    %v374 = vunpack.c.h.b16 %v123
    %v375 = vunpack.c.l.b16 %v124
    %v376 = vunpack.c.h.b16 %v124
    %v377 = vunpack.c.l.b16 %v125
    %v378 = vunpack.c.h.b16 %v125
    %v379 = vunpack.c.l.b16 %v126
    %v380 = vunpack.c.h.b16 %v126
    %v381 = vunpack.c.l.b16 %v127
    %v382 = vunpack.c.h.b16 %v127
    %v383 = vunpack.c.l.b16 %v128
    %v384 = vunpack.c.h.b16 %v128
    %v385 = vunpack.c.l.b16 %v129
    %v386 = vunpack.c.h.b16 %v129
    %v387 = vunpack.c.l.b16 %v130
    %v388 = vunpack.c.h.b16 %v130
    %v389 = vunpack.c.l.b16 %v131
    %v390 = vunpack.c.h.b16 %v131
    %v391 = vunpack.c.l.b16 %v132
    %v392 = vunpack.c.h.b16 %v132
    %v393 = vunpack.c.l.b16 %v133
    %v394 = vunpack.c.h.b16 %v133
    %v395 = vunpack.c.l.b16 %v134
    %v396 = vunpack.c.h.b16 %v134
    %v397 = vunpack.c.l.b16 %v135
    %v398 = vunpack.c.h.b16 %v135
    %v399 = vunpack.c.l.b16 %v136
    %v400 = vunpack.c.h.b16 %v136
    %v401 = vunpack.c.l.b16 %v137
    %v402 = vunpack.c.h.b16 %v137
    %v403 = vunpack.c.l.b16 %v138
    %v404 = vunpack.c.h.b16 %v138
    %v405 = vunpack.c.l.b16 %v139
    %v406 = vunpack.c.h.b16 %v139
    %v407 = vunpack.c.l.b16 %v140
    %v408 = vunpack.c.h.b16 %v140
    %v409 = vunpack.c.l.b16 %v141
    %v410 = vunpack.c.h.b16 %v141
    %v411 = vunpack.c.l.b16 %v142
    %v412 = vunpack.c.h.b16 %v142
    %v413 = vunpack.c.l.b16 %v143
    %v414 = vunpack.c.h.b16 %v143
    %v415 = vunpack.c.l.b16 %v144
    %v416 = vunpack.c.h.b16 %v144
    %v417 = vunpack.c.l.b16 %v145
    %v418 = vunpack.c.h.b16 %v145
    %v419 = vunpack.c.l.b16 %v146
    %v420 = vunpack.c.h.b16 %v146
    %v421 = vunpack.c.l.b16 %v147
    %v422 = vunpack.c.h.b16 %v147
    %v423 = vpack.c.b16 %v297, %v295
    %v424 = vpack.c.b16 %v298, %v296
    %v425 = vpack.c.b16 %v301, %v299
    %v426 = vpack.c.b16 %v302, %v300
    %v427 = vpack.c.b16 %v305, %v303
    %v428 = vpack.c.b16 %v306, %v304
    %v429 = vpack.c.b16 %v309, %v307
    %v430 = vpack.c.b16 %v310, %v308
    %v431 = vpack.c.b16 %v313, %v311
    %v432 = vpack.c.b16 %v314, %v312
    %v433 = vpack.c.b16 %v317, %v315
    %v434 = vpack.c.b16 %v318, %v316
    %v435 = vpack.c.b16 %v321, %v319
    %v436 = vpack.c.b16 %v322, %v320
    %v437 = vpack.c.b16 %v325, %v323
    %v438 = vpack.c.b16 %v326, %v324
    %v439 = vpack.c.b16 %v329, %v327
    %v440 = vpack.c.b16 %v330, %v328
    %v441 = vpack.c.b16 %v333, %v331
    %v442 = vpack.c.b16 %v334, %v332
    %v443 = vpack.c.b16 %v337, %v335
    %v444 = vpack.c.b16 %v338, %v336
    %v445 = vpack.c.b16 %v341, %v339
    %v446 = vpack.c.b16 %v342, %v340
    %v447 = vpack.c.b16 %v345, %v343
    %v448 = vpack.c.b16 %v346, %v344
    %v449 = vpack.c.b16 %v349, %v347
    %v450 = vpack.c.b16 %v350, %v348
    %v451 = vpack.c.b16 %v353, %v351
    %v452 = vpack.c.b16 %v354, %v352
    %v453 = vpack.c.b16 %v357, %v355
    %v454 = vpack.c.b16 %v358, %v356
    %v455 = vpack.c.b16 %v361, %v359
    %v456 = vpack.c.b16 %v362, %v360
    %v457 = vpack.c.b16 %v365, %v363
    %v458 = vpack.c.b16 %v366, %v364
    %v459 = vpack.c.b16 %v369, %v367
    %v460 = vpack.c.b16 %v370, %v368
    %v461 = vpack.c.b16 %v373, %v371
    %v462 = vpack.c.b16 %v374, %v372
    %v463 = vpack.c.b16 %v377, %v375
    %v464 = vpack.c.b16 %v378, %v376
    %v465 = vpack.c.b16 %v381, %v379
    %v466 = vpack.c.b16 %v382, %v380
    %v467 = vpack.c.b16 %v385, %v383
    %v468 = vpack.c.b16 %v386, %v384
    %v469 = vpack.c.b16 %v389, %v387
    %v470 = vpack.c.b16 %v390, %v388
    %v471 = vpack.c.b16 %v393, %v391
    %v472 = vpack.c.b16 %v394, %v392
    %v473 = vpack.c.b16 %v397, %v395
    %v474 = vpack.c.b16 %v398, %v396
    %v475 = vpack.c.b16 %v401, %v399
    %v476 = vpack.c.b16 %v402, %v400
    %v477 = vpack.c.b16 %v405, %v403
    %v478 = vpack.c.b16 %v406, %v404
    %v479 = vpack.c.b16 %v409, %v407
    %v480 = vpack.c.b16 %v410, %v408
    %v481 = vpack.c.b16 %v413, %v411
    %v482 = vpack.c.b16 %v414, %v412
    %v483 = vpack.c.b16 %v417, %v415
    %v484 = vpack.c.b16 %v418, %v416
    %v485 = vpack.c.b16 %v421, %v419
    %v486 = vpack.c.b16 %v422, %v420
    %v538 = vunpack.c.l.b16 %v212
    %v539 = vunpack.c.l.b16 %v213
    %v540 = vunpack.c.l.b16 %v214
    %v541 = vunpack.c.l.b16 %v215
    %v542 = vunpack.c.l.b16 %v216
    %v543 = vunpack.c.l.b16 %v217
    %v544 = vunpack.c.l.b16 %v218
    %v545 = vunpack.c.l.b16 %v219
    %v546 = vunpack.c.l.b16 %v220
    %v547 = vunpack.c.l.b16 %v221
    %v548 = vunpack.c.l.b16 %v222
    %v549 = vunpack.c.l.b16 %v223
    %v550 = vunpack.c.l.b16 %v224
    %v551 = vunpack.c.l.b16 %v225
    %v552 = vunpack.c.l.b16 %v226
    %v553 = vunpack.c.l.b16 %v227
    %v554 = vunpack.c.l.b16 %v228
    %v555 = vunpack.c.l.b16 %v229
    %v556 = vunpack.c.l.b16 %v230
    %v557 = vpack.c.b16 %v539, %v538
    %v558 = vpack.c.b16 %v541, %v540
    %v559 = vpack.c.b16 %v543, %v542
    %v560 = vpack.c.b16 %v545, %v544
    %v561 = vpack.c.b16 %v547, %v546
    %v562 = vpack.c.b16 %v549, %v548
    %v563 = vpack.c.b16 %v551, %v550
    %v564 = vpack.c.b16 %v553, %v552
    %v565 = vpack.c.b16 %v555, %v554
    %v566 = vpack.c.b16 %v556, %v556
    %vm576 = vcmask 154624
    %v578 = vsel %vm576, %v424, 0
    %v581 = vsel %vm576, %v426, 0
    %v584 = vsel %vm576, %v428, 0
    %v587 = vsel %vm576, %v430, 0
    %v590 = vsel %vm576, %v432, 0
    %v593 = vsel %vm576, %v434, 0
    %v596 = vsel %vm576, %v436, 0
    %v599 = vsel %vm576, %v438, 0
    %v602 = vsel %vm576, %v440, 0
    %v605 = vsel %vm576, %v442, 0
    %v608 = vsel %vm576, %v444, 0
    %v611 = vsel %vm576, %v446, 0
    %v614 = vsel %vm576, %v448, 0
    %v617 = vsel %vm576, %v450, 0
    %v620 = vsel %vm576, %v452, 0
    %v623 = vsel %vm576, %v454, 0
    %v626 = vsel %vm576, %v456, 0
    %v629 = vsel %vm576, %v458, 0
    %v632 = vsel %vm576, %v460, 0
    %v635 = vsel %vm576, %v462, 0
    %v638 = vsel %vm576, %v464, 0
    %v641 = vsel %vm576, %v466, 0
    %v644 = vsel %vm576, %v468, 0
    %v647 = vsel %vm576, %v470, 0
    %v650 = vsel %vm576, %v472, 0
    %v653 = vsel %vm576, %v474, 0
    %v656 = vsel %vm576, %v476, 0
    %v659 = vsel %vm576, %v478, 0
    %v662 = vsel %vm576, %v480, 0
    %v665 = vsel %vm576, %v482, 0
    %v668 = vsel %vm576, %v484, 0
    %v671 = vsel %vm576, %v486, 0
    %vm673 = vcmask 1040384
    %vm674 = vcmask 1041408
    %v675 = vsel %vm673, 4294967295, 65535
    %v676 = vsel %vm674, %v675, 0
    %v678 = vand.u32 %v566, %v676
    %680 = vmatprep.subr.bf16.mxu0 0
    %681 = vmatpush1.bf16.msra.mxu0 %v564
    %682 = vmatprep.subr.bf16.mxu0 0
    %683 = vmatpush1.bf16.msra.mxu0 %v563
    %684 = vmatprep.subr.bf16.mxu0 0
    %685 = vmatpush1.bf16.msra.mxu0 %v562
    %686 = vmatprep.subr.bf16.mxu0 0
    %687 = vmatpush1.bf16.msra.mxu0 %v561
    %688 = vmatprep.subr.bf16.mxu0 0
    %689 = vmatpush1.bf16.msra.mxu0 %v560
    %690 = vmatprep.subr.bf16.mxu0 0
    %691 = vmatpush1.bf16.msra.mxu0 %v559
    %692 = vmatprep.subr.bf16.mxu0 0
    %693 = vmatpush1.bf16.msra.mxu0 %v558
    %694 = vmatprep.subr.bf16.mxu0 0
    %695 = vmatpush1.bf16.msra.mxu0 %v557
    %696 = vmatprep.subr.bf16.mxu0 0
    %697 = vmatpush2.bf16.msra.mxu0 0
    %698 = vmatprep.subr.bf16.mxu0 0
    %699 = vmatpush2.bf16.msra.mxu0 0
    %700 = vmatprep.subr.bf16.mxu0 0
    %701 = vmatpush2.bf16.msra.mxu0 0
    %702 = vmatprep.subr.bf16.mxu0 0
    %703 = vmatpush2.bf16.msra.mxu0 0
    %704 = vmatprep.subr.bf16.mxu0 0
    %705 = vmatpush2.bf16.msra.mxu0 0
    %706 = vmatprep.subr.bf16.mxu0 0
    %707 = vmatpush2.bf16.msra.mxu0 0
    %708 = vmatprep.subr.bf16.mxu0 0
    %709 = vmatpush2.bf16.msra.mxu0 %v678
    %710 = vmatprep.subr.bf16.mxu0 0
    %711 = vmatpush2.bf16.msra.mxu0 %v565
    %712 = vmatprep.mubr.bf16.mxu0 %v578
    %713 = vmatmul.mubr.bf16.gmra.mxu0 %v423
    %v714 = vpop.f32.mrf.mxu0
    %v715 = vadd.f32 0.0, %v714
    %v716 = vpop.f32.mrf.mxu0
    %v717 = vpop.f32.mrf.mxu0
    %v718 = vadd.f32 0.0, %v717
    %v719 = vpop.f32.mrf.mxu0
    %720 = vmatprep.mubr.bf16.mxu0 %v581
    %721 = vmatmul.mubr.bf16.gmra.mxu0 %v425
    %v722 = vpop.f32.mrf.mxu0
    %v723 = vadd.f32 0.0, %v722
    %v724 = vpop.f32.mrf.mxu0
    %v725 = vpop.f32.mrf.mxu0
    %v726 = vadd.f32 0.0, %v725
    %v727 = vpop.f32.mrf.mxu0
    %728 = vmatprep.mubr.bf16.mxu0 %v584
    %729 = vmatmul.mubr.bf16.gmra.mxu0 %v427
    %v730 = vpop.f32.mrf.mxu0
    %v731 = vadd.f32 0.0, %v730
    %v732 = vpop.f32.mrf.mxu0
    %v733 = vpop.f32.mrf.mxu0
    %v734 = vadd.f32 0.0, %v733
    %v735 = vpop.f32.mrf.mxu0
    %736 = vmatprep.mubr.bf16.mxu0 %v587
    %737 = vmatmul.mubr.bf16.gmra.mxu0 %v429
    %v738 = vpop.f32.mrf.mxu0
    %v739 = vadd.f32 0.0, %v738
    %v740 = vpop.f32.mrf.mxu0
    %v741 = vpop.f32.mrf.mxu0
    %v742 = vadd.f32 0.0, %v741
    %v743 = vpop.f32.mrf.mxu0
    %744 = vmatprep.mubr.bf16.mxu0 %v590
    %745 = vmatmul.mubr.bf16.gmra.mxu0 %v431
    %v746 = vpop.f32.mrf.mxu0
    %v747 = vadd.f32 0.0, %v746
    %v748 = vpop.f32.mrf.mxu0
    %v749 = vpop.f32.mrf.mxu0
    %v750 = vadd.f32 0.0, %v749
    %v751 = vpop.f32.mrf.mxu0
    %752 = vmatprep.mubr.bf16.mxu0 %v593
    %753 = vmatmul.mubr.bf16.gmra.mxu0 %v433
    %v754 = vpop.f32.mrf.mxu0
    %v755 = vadd.f32 0.0, %v754
    %v756 = vpop.f32.mrf.mxu0
    %v757 = vpop.f32.mrf.mxu0
    %v758 = vadd.f32 0.0, %v757
    %v759 = vpop.f32.mrf.mxu0
    %760 = vmatprep.mubr.bf16.mxu0 %v596
    %761 = vmatmul.mubr.bf16.gmra.mxu0 %v435
    %v762 = vpop.f32.mrf.mxu0
    %v763 = vadd.f32 0.0, %v762
    %v764 = vpop.f32.mrf.mxu0
    %v765 = vpop.f32.mrf.mxu0
    %v766 = vadd.f32 0.0, %v765
    %v767 = vpop.f32.mrf.mxu0
    %768 = vmatprep.mubr.bf16.mxu0 %v599
    %769 = vmatmul.mubr.bf16.gmra.mxu0 %v437
    %v770 = vpop.f32.mrf.mxu0
    %v771 = vadd.f32 0.0, %v770
    %v772 = vpop.f32.mrf.mxu0
    %v773 = vpop.f32.mrf.mxu0
    %v774 = vadd.f32 0.0, %v773
    %v775 = vpop.f32.mrf.mxu0
    %776 = vmatprep.mubr.bf16.mxu0 %v602
    %777 = vmatmul.mubr.bf16.gmra.mxu0 %v439
    %v778 = vpop.f32.mrf.mxu0
    %v779 = vadd.f32 0.0, %v778
    %v780 = vpop.f32.mrf.mxu0
    %v781 = vpop.f32.mrf.mxu0
    %v782 = vadd.f32 0.0, %v781
    %v783 = vpop.f32.mrf.mxu0
    %784 = vmatprep.mubr.bf16.mxu0 %v605
    %785 = vmatmul.mubr.bf16.gmra.mxu0 %v441
    %v786 = vpop.f32.mrf.mxu0
    %v787 = vadd.f32 0.0, %v786
    %v788 = vpop.f32.mrf.mxu0
    %v789 = vpop.f32.mrf.mxu0
    %v790 = vadd.f32 0.0, %v789
    %v791 = vpop.f32.mrf.mxu0
    %792 = vmatprep.mubr.bf16.mxu0 %v608
    %793 = vmatmul.mubr.bf16.gmra.mxu0 %v443
    %v794 = vpop.f32.mrf.mxu0
    %v795 = vadd.f32 0.0, %v794
    %v796 = vpop.f32.mrf.mxu0
    %v797 = vpop.f32.mrf.mxu0
    %v798 = vadd.f32 0.0, %v797
    %v799 = vpop.f32.mrf.mxu0
    %800 = vmatprep.mubr.bf16.mxu0 %v611
    %801 = vmatmul.mubr.bf16.gmra.mxu0 %v445
    %v802 = vpop.f32.mrf.mxu0
    %v803 = vadd.f32 0.0, %v802
    %v804 = vpop.f32.mrf.mxu0
    %v805 = vpop.f32.mrf.mxu0
    %v806 = vadd.f32 0.0, %v805
    %v807 = vpop.f32.mrf.mxu0
    %808 = vmatprep.mubr.bf16.mxu0 %v614
    %809 = vmatmul.mubr.bf16.gmra.mxu0 %v447
    %v810 = vpop.f32.mrf.mxu0
    %v811 = vadd.f32 0.0, %v810
    %v812 = vpop.f32.mrf.mxu0
    %v813 = vpop.f32.mrf.mxu0
    %v814 = vadd.f32 0.0, %v813
    %v815 = vpop.f32.mrf.mxu0
    %816 = vmatprep.mubr.bf16.mxu0 %v617
    %817 = vmatmul.mubr.bf16.gmra.mxu0 %v449
    %v818 = vpop.f32.mrf.mxu0
    %v819 = vadd.f32 0.0, %v818
    %v820 = vpop.f32.mrf.mxu0
    %v821 = vpop.f32.mrf.mxu0
    %v822 = vadd.f32 0.0, %v821
    %v823 = vpop.f32.mrf.mxu0
    %824 = vmatprep.mubr.bf16.mxu0 %v620
    %825 = vmatmul.mubr.bf16.gmra.mxu0 %v451
    %v826 = vpop.f32.mrf.mxu0
    %v827 = vadd.f32 0.0, %v826
    %v828 = vpop.f32.mrf.mxu0
    %v829 = vpop.f32.mrf.mxu0
    %v830 = vadd.f32 0.0, %v829
    %v831 = vpop.f32.mrf.mxu0
    %832 = vmatprep.mubr.bf16.mxu0 %v623
    %833 = vmatmul.mubr.bf16.gmra.mxu0 %v453
    %v834 = vpop.f32.mrf.mxu0
    %v835 = vadd.f32 0.0, %v834
    %v836 = vpop.f32.mrf.mxu0
    %v837 = vpop.f32.mrf.mxu0
    %v838 = vadd.f32 0.0, %v837
    %v839 = vpop.f32.mrf.mxu0
    %840 = vmatprep.mubr.bf16.mxu0 %v626
    %841 = vmatmul.mubr.bf16.gmra.mxu0 %v455
    %v842 = vpop.f32.mrf.mxu0
    %v843 = vadd.f32 0.0, %v842
    %v844 = vpop.f32.mrf.mxu0
    %v845 = vpop.f32.mrf.mxu0
    %v846 = vadd.f32 0.0, %v845
    %v847 = vpop.f32.mrf.mxu0
    %848 = vmatprep.mubr.bf16.mxu0 %v629
    %849 = vmatmul.mubr.bf16.gmra.mxu0 %v457
    %v850 = vpop.f32.mrf.mxu0
    %v851 = vadd.f32 0.0, %v850
    %v852 = vpop.f32.mrf.mxu0
    %v853 = vpop.f32.mrf.mxu0
    %v854 = vadd.f32 0.0, %v853
    %v855 = vpop.f32.mrf.mxu0
    %856 = vmatprep.mubr.bf16.mxu0 %v632
    %857 = vmatmul.mubr.bf16.gmra.mxu0 %v459
    %v858 = vpop.f32.mrf.mxu0
    %v859 = vadd.f32 0.0, %v858
    %v860 = vpop.f32.mrf.mxu0
    %v861 = vpop.f32.mrf.mxu0
    %v862 = vadd.f32 0.0, %v861
    %v863 = vpop.f32.mrf.mxu0
    %864 = vmatprep.mubr.bf16.mxu0 %v635
    %865 = vmatmul.mubr.bf16.gmra.mxu0 %v461
    %v866 = vpop.f32.mrf.mxu0
    %v867 = vadd.f32 0.0, %v866
    %v868 = vpop.f32.mrf.mxu0
    %v869 = vpop.f32.mrf.mxu0
    %v870 = vadd.f32 0.0, %v869
    %v871 = vpop.f32.mrf.mxu0
    %872 = vmatprep.mubr.bf16.mxu0 %v638
    %873 = vmatmul.mubr.bf16.gmra.mxu0 %v463
    %v874 = vpop.f32.mrf.mxu0
    %v875 = vadd.f32 0.0, %v874
    %v876 = vpop.f32.mrf.mxu0
    %v877 = vpop.f32.mrf.mxu0
    %v878 = vadd.f32 0.0, %v877
    %v879 = vpop.f32.mrf.mxu0
    %880 = vmatprep.mubr.bf16.mxu0 %v641
    %881 = vmatmul.mubr.bf16.gmra.mxu0 %v465
    %v882 = vpop.f32.mrf.mxu0
    %v883 = vadd.f32 0.0, %v882
    %v884 = vpop.f32.mrf.mxu0
    %v885 = vpop.f32.mrf.mxu0
    %v886 = vadd.f32 0.0, %v885
    %v887 = vpop.f32.mrf.mxu0
    %888 = vmatprep.mubr.bf16.mxu0 %v644
    %889 = vmatmul.mubr.bf16.gmra.mxu0 %v467
    %v890 = vpop.f32.mrf.mxu0
    %v891 = vadd.f32 0.0, %v890
    %v892 = vpop.f32.mrf.mxu0
    %v893 = vpop.f32.mrf.mxu0
    %v894 = vadd.f32 0.0, %v893
    %v895 = vpop.f32.mrf.mxu0
    %896 = vmatprep.mubr.bf16.mxu0 %v647
    %897 = vmatmul.mubr.bf16.gmra.mxu0 %v469
    %v898 = vpop.f32.mrf.mxu0
    %v899 = vadd.f32 0.0, %v898
    %v900 = vpop.f32.mrf.mxu0
    %v901 = vpop.f32.mrf.mxu0
    %v902 = vadd.f32 0.0, %v901
    %v903 = vpop.f32.mrf.mxu0
    %904 = vmatprep.mubr.bf16.mxu0 %v650
    %905 = vmatmul.mubr.bf16.gmra.mxu0 %v471
    %v906 = vpop.f32.mrf.mxu0
    %v907 = vadd.f32 0.0, %v906
    %v908 = vpop.f32.mrf.mxu0
    %v909 = vpop.f32.mrf.mxu0
    %v910 = vadd.f32 0.0, %v909
    %v911 = vpop.f32.mrf.mxu0
    %912 = vmatprep.mubr.bf16.mxu0 %v653
    %913 = vmatmul.mubr.bf16.gmra.mxu0 %v473
    %v914 = vpop.f32.mrf.mxu0
    %v915 = vadd.f32 0.0, %v914
    %v916 = vpop.f32.mrf.mxu0
    %v917 = vpop.f32.mrf.mxu0
    %v918 = vadd.f32 0.0, %v917
    %v919 = vpop.f32.mrf.mxu0
    %920 = vmatprep.mubr.bf16.mxu0 %v656
    %921 = vmatmul.mubr.bf16.gmra.mxu0 %v475
    %v922 = vpop.f32.mrf.mxu0
    %v923 = vadd.f32 0.0, %v922
    %v924 = vpop.f32.mrf.mxu0
    %v925 = vpop.f32.mrf.mxu0
    %v926 = vadd.f32 0.0, %v925
    %v927 = vpop.f32.mrf.mxu0
    %928 = vmatprep.mubr.bf16.mxu0 %v659
    %929 = vmatmul.mubr.bf16.gmra.mxu0 %v477
    %v930 = vpop.f32.mrf.mxu0
    %v931 = vadd.f32 0.0, %v930
    %v932 = vpop.f32.mrf.mxu0
    %v933 = vpop.f32.mrf.mxu0
    %v934 = vadd.f32 0.0, %v933
    %v935 = vpop.f32.mrf.mxu0
    %936 = vmatprep.mubr.bf16.mxu0 %v662
    %937 = vmatmul.mubr.bf16.gmra.mxu0 %v479
    %v938 = vpop.f32.mrf.mxu0
    %v939 = vadd.f32 0.0, %v938
    %v940 = vpop.f32.mrf.mxu0
    %v941 = vpop.f32.mrf.mxu0
    %v942 = vadd.f32 0.0, %v941
    %v943 = vpop.f32.mrf.mxu0
    %944 = vmatprep.mubr.bf16.mxu0 %v665
    %945 = vmatmul.mubr.bf16.gmra.mxu0 %v481
    %v946 = vpop.f32.mrf.mxu0
    %v947 = vadd.f32 0.0, %v946
    %v948 = vpop.f32.mrf.mxu0
    %v949 = vpop.f32.mrf.mxu0
    %v950 = vadd.f32 0.0, %v949
    %v951 = vpop.f32.mrf.mxu0
    %952 = vmatprep.mubr.bf16.mxu0 %v668
    %953 = vmatmul.mubr.bf16.gmra.mxu0 %v483
    %v954 = vpop.f32.mrf.mxu0
    %v955 = vadd.f32 0.0, %v954
    %v956 = vpop.f32.mrf.mxu0
    %v957 = vpop.f32.mrf.mxu0
    %v958 = vadd.f32 0.0, %v957
    %v959 = vpop.f32.mrf.mxu0
    %960 = vmatprep.mubr.bf16.mxu0 %v671
    %961 = vmatmul.mubr.bf16.gmra.mxu0 %v485
    %v962 = vpop.f32.mrf.mxu0
    %v963 = vadd.f32 0.0, %v962
    %v964 = vpop.f32.mrf.mxu0
    %v965 = vpop.f32.mrf.mxu0
    %v966 = vadd.f32 0.0, %v965
    %v967 = vpop.f32.mrf.mxu0
    %968 = vdwg.mxu0
    %v969 = vadd.f32 %v148, %v715
    %v970 = vadd.f32 %v149, %v718
    %v971 = vadd.f32 %v150, %v723
    %v972 = vadd.f32 %v151, %v726
    %v973 = vadd.f32 %v152, %v731
    %v974 = vadd.f32 %v153, %v734
    %v975 = vadd.f32 %v154, %v739
    %v976 = vadd.f32 %v155, %v742
    %v977 = vadd.f32 %v156, %v747
    %v978 = vadd.f32 %v157, %v750
    %v979 = vadd.f32 %v158, %v755
    %v980 = vadd.f32 %v159, %v758
    %v981 = vadd.f32 %v160, %v763
    %v982 = vadd.f32 %v161, %v766
    %v983 = vadd.f32 %v162, %v771
    %v984 = vadd.f32 %v163, %v774
    %v985 = vadd.f32 %v164, %v779
    %v986 = vadd.f32 %v165, %v782
    %v987 = vadd.f32 %v166, %v787
    %v988 = vadd.f32 %v167, %v790
    %v989 = vadd.f32 %v168, %v795
    %v990 = vadd.f32 %v169, %v798
    %v991 = vadd.f32 %v170, %v803
    %v992 = vadd.f32 %v171, %v806
    %v993 = vadd.f32 %v172, %v811
    %v994 = vadd.f32 %v173, %v814
    %v995 = vadd.f32 %v174, %v819
    %v996 = vadd.f32 %v175, %v822
    %v997 = vadd.f32 %v176, %v827
    %v998 = vadd.f32 %v177, %v830
    %v999 = vadd.f32 %v178, %v835
    %v1000 = vadd.f32 %v179, %v838
    %v1001 = vadd.f32 %v180, %v843
    %v1002 = vadd.f32 %v181, %v846
    %v1003 = vadd.f32 %v182, %v851
    %v1004 = vadd.f32 %v183, %v854
    %v1005 = vadd.f32 %v184, %v859
    %v1006 = vadd.f32 %v185, %v862
    %v1007 = vadd.f32 %v186, %v867
    %v1008 = vadd.f32 %v187, %v870
    %v1009 = vadd.f32 %v188, %v875
    %v1010 = vadd.f32 %v189, %v878
    %v1011 = vadd.f32 %v190, %v883
    %v1012 = vadd.f32 %v191, %v886
    %v1013 = vadd.f32 %v192, %v891
    %v1014 = vadd.f32 %v193, %v894
    %v1015 = vadd.f32 %v194, %v899
    %v1016 = vadd.f32 %v195, %v902
    %v1017 = vadd.f32 %v196, %v907
    %v1018 = vadd.f32 %v197, %v910
    %v1019 = vadd.f32 %v198, %v915
    %v1020 = vadd.f32 %v199, %v918
    %v1021 = vadd.f32 %v200, %v923
    %v1022 = vadd.f32 %v201, %v926
    %v1023 = vadd.f32 %v202, %v931
    %v1024 = vadd.f32 %v203, %v934
    %v1025 = vadd.f32 %v204, %v939
    %v1026 = vadd.f32 %v205, %v942
    %v1027 = vadd.f32 %v206, %v947
    %v1028 = vadd.f32 %v207, %v950
    %v1029 = vadd.f32 %v208, %v955
    %v1030 = vadd.f32 %v209, %v958
    %v1031 = vadd.f32 %v210, %v963
    %v1032 = vadd.f32 %v211, %v966
    %vm1033 = vcmask 523264
    %1034 = vst.msk [vmem:[#allocation2] sm:$0xff] %vm1033, %v969
    %1035 = vst.msk [vmem:[#allocation2 + $0x8] sm:$0xff] %vm1033, %v970
    %1036 = vst.msk [vmem:[#allocation2 + $0x10] sm:$0xff] %vm1033, %v971
    %1037 = vst.msk [vmem:[#allocation2 + $0x18] sm:$0xff] %vm1033, %v972
    %1038 = vst.msk [vmem:[#allocation2 + $0x20] sm:$0xff] %vm1033, %v973
    %1039 = vst.msk [vmem:[#allocation2 + $0x28] sm:$0xff] %vm1033, %v974
    %1040 = vst.msk [vmem:[#allocation2 + $0x30] sm:$0xff] %vm1033, %v975
    %1041 = vst.msk [vmem:[#allocation2 + $0x38] sm:$0xff] %vm1033, %v976
    %1042 = vst.msk [vmem:[#allocation2 + $0x40] sm:$0xff] %vm1033, %v977
    %1043 = vst.msk [vmem:[#allocation2 + $0x48] sm:$0xff] %vm1033, %v978
    %1044 = vst.msk [vmem:[#allocation2 + $0x50] sm:$0xff] %vm1033, %v979
    %1045 = vst.msk [vmem:[#allocation2 + $0x58] sm:$0xff] %vm1033, %v980
    %1046 = vst.msk [vmem:[#allocation2 + $0x60] sm:$0xff] %vm1033, %v981
    %1047 = vst.msk [vmem:[#allocation2 + $0x68] sm:$0xff] %vm1033, %v982
    %1048 = vst.msk [vmem:[#allocation2 + $0x70] sm:$0xff] %vm1033, %v983
    %1049 = vst.msk [vmem:[#allocation2 + $0x78] sm:$0xff] %vm1033, %v984
    %1050 = vst.msk [vmem:[#allocation2 + $0x80] sm:$0xff] %vm1033, %v985
    %1051 = vst.msk [vmem:[#allocation2 + $0x88] sm:$0xff] %vm1033, %v986
    %1052 = vst.msk [vmem:[#allocation2 + $0x90] sm:$0xff] %vm1033, %v987
    %1053 = vst.msk [vmem:[#allocation2 + $0x98] sm:$0xff] %vm1033, %v988
    %1054 = vst.msk [vmem:[#allocation2 + $0xa0] sm:$0xff] %vm1033, %v989
    %1055 = vst.msk [vmem:[#allocation2 + $0xa8] sm:$0xff] %vm1033, %v990
    %1056 = vst.msk [vmem:[#allocation2 + $0xb0] sm:$0xff] %vm1033, %v991
    %1057 = vst.msk [vmem:[#allocation2 + $0xb8] sm:$0xff] %vm1033, %v992
    %1058 = vst.msk [vmem:[#allocation2 + $0xc0] sm:$0xff] %vm1033, %v993
    %1059 = vst.msk [vmem:[#allocation2 + $0xc8] sm:$0xff] %vm1033, %v994
    %1060 = vst.msk [vmem:[#allocation2 + $0xd0] sm:$0xff] %vm1033, %v995
    %1061 = vst.msk [vmem:[#allocation2 + $0xd8] sm:$0xff] %vm1033, %v996
    %1062 = vst.msk [vmem:[#allocation2 + $0xe0] sm:$0xff] %vm1033, %v997
    %1063 = vst.msk [vmem:[#allocation2 + $0xe8] sm:$0xff] %vm1033, %v998
    %1064 = vst.msk [vmem:[#allocation2 + $0xf0] sm:$0xff] %vm1033, %v999
    %1065 = vst.msk [vmem:[#allocation2 + $0xf8] sm:$0xff] %vm1033, %v1000
    %1066 = vst.msk [vmem:[#allocation2 + $0x100] sm:$0xff] %vm1033, %v1001
    %1067 = vst.msk [vmem:[#allocation2 + $0x108] sm:$0xff] %vm1033, %v1002
    %1068 = vst.msk [vmem:[#allocation2 + $0x110] sm:$0xff] %vm1033, %v1003
    %1069 = vst.msk [vmem:[#allocation2 + $0x118] sm:$0xff] %vm1033, %v1004
    %1070 = vst.msk [vmem:[#allocation2 + $0x120] sm:$0xff] %vm1033, %v1005
    %1071 = vst.msk [vmem:[#allocation2 + $0x128] sm:$0xff] %vm1033, %v1006
    %1072 = vst.msk [vmem:[#allocation2 + $0x130] sm:$0xff] %vm1033, %v1007
    %1073 = vst.msk [vmem:[#allocation2 + $0x138] sm:$0xff] %vm1033, %v1008
    %1074 = vst.msk [vmem:[#allocation2 + $0x140] sm:$0xff] %vm1033, %v1009
    %1075 = vst.msk [vmem:[#allocation2 + $0x148] sm:$0xff] %vm1033, %v1010
    %1076 = vst.msk [vmem:[#allocation2 + $0x150] sm:$0xff] %vm1033, %v1011
    %1077 = vst.msk [vmem:[#allocation2 + $0x158] sm:$0xff] %vm1033, %v1012
    %1078 = vst.msk [vmem:[#allocation2 + $0x160] sm:$0xff] %vm1033, %v1013
    %1079 = vst.msk [vmem:[#allocation2 + $0x168] sm:$0xff] %vm1033, %v1014
    %1080 = vst.msk [vmem:[#allocation2 + $0x170] sm:$0xff] %vm1033, %v1015
    %1081 = vst.msk [vmem:[#allocation2 + $0x178] sm:$0xff] %vm1033, %v1016
    %1082 = vst.msk [vmem:[#allocation2 + $0x180] sm:$0xff] %vm1033, %v1017
    %1083 = vst.msk [vmem:[#allocation2 + $0x188] sm:$0xff] %vm1033, %v1018
    %1084 = vst.msk [vmem:[#allocation2 + $0x190] sm:$0xff] %vm1033, %v1019
    %1085 = vst.msk [vmem:[#allocation2 + $0x198] sm:$0xff] %vm1033, %v1020
    %1086 = vst.msk [vmem:[#allocation2 + $0x1a0] sm:$0xff] %vm1033, %v1021
    %1087 = vst.msk [vmem:[#allocation2 + $0x1a8] sm:$0xff] %vm1033, %v1022
    %1088 = vst.msk [vmem:[#allocation2 + $0x1b0] sm:$0xff] %vm1033, %v1023
    %1089 = vst.msk [vmem:[#allocation2 + $0x1b8] sm:$0xff] %vm1033, %v1024
    %1090 = vst.msk [vmem:[#allocation2 + $0x1c0] sm:$0xff] %vm1033, %v1025
    %1091 = vst.msk [vmem:[#allocation2 + $0x1c8] sm:$0xff] %vm1033, %v1026
    %1092 = vst.msk [vmem:[#allocation2 + $0x1d0] sm:$0xff] %vm1033, %v1027
    %1093 = vst.msk [vmem:[#allocation2 + $0x1d8] sm:$0xff] %vm1033, %v1028
    %1094 = vst.msk [vmem:[#allocation2 + $0x1e0] sm:$0xff] %vm1033, %v1029
    %1095 = vst.msk [vmem:[#allocation2 + $0x1e8] sm:$0xff] %vm1033, %v1030
    %1096 = vst.msk [vmem:[#allocation2 + $0x1f0] sm:$0xff] %vm1033, %v1031
    %1097 = vst.msk [vmem:[#allocation2 + $0x1f8] sm:$0xff] %vm1033, %v1032
    // Predicated region
    $region14: #{tpu_custom_call.1} parent=1 // pred_check
      %p1098 = pneg %p15
    $region15: #{tpu_custom_call.1} parent=1 // pred_check_branch
      %1100 = sbr.rel (%p1098) target = $region17
    $region16: #{tpu_custom_call.1} parent=1 // pred_region
      %v1101 = vld [vmem:[#allocation2] sm:$0xff]
      %v1102 = vld [vmem:[#allocation2 + $0x8] sm:$0xff]
      %v1103 = vld [vmem:[#allocation2 + $0x10] sm:$0xff]
      %v1104 = vld [vmem:[#allocation2 + $0x18] sm:$0xff]
      %v1105 = vld [vmem:[#allocation2 + $0x20] sm:$0xff]
      %v1106 = vld [vmem:[#allocation2 + $0x28] sm:$0xff]
      %v1107 = vld [vmem:[#allocation2 + $0x30] sm:$0xff]
      %v1108 = vld [vmem:[#allocation2 + $0x38] sm:$0xff]
      %v1109 = vld [vmem:[#allocation2 + $0x40] sm:$0xff]
      %v1110 = vld [vmem:[#allocation2 + $0x48] sm:$0xff]
      %v1111 = vld [vmem:[#allocation2 + $0x50] sm:$0xff]
      %v1112 = vld [vmem:[#allocation2 + $0x58] sm:$0xff]
      %v1113 = vld [vmem:[#allocation2 + $0x60] sm:$0xff]
      %v1114 = vld [vmem:[#allocation2 + $0x68] sm:$0xff]
      %v1115 = vld [vmem:[#allocation2 + $0x70] sm:$0xff]
      %v1116 = vld [vmem:[#allocation2 + $0x78] sm:$0xff]
      %v1117 = vld [vmem:[#allocation2 + $0x80] sm:$0xff]
      %v1118 = vld [vmem:[#allocation2 + $0x88] sm:$0xff]
      %v1119 = vld [vmem:[#allocation2 + $0x90] sm:$0xff]
      %v1120 = vld [vmem:[#allocation2 + $0x98] sm:$0xff]
      %v1121 = vld [vmem:[#allocation2 + $0xa0] sm:$0xff]
      %v1122 = vld [vmem:[#allocation2 + $0xa8] sm:$0xff]
      %v1123 = vld [vmem:[#allocation2 + $0xb0] sm:$0xff]
      %v1124 = vld [vmem:[#allocation2 + $0xb8] sm:$0xff]
      %v1125 = vld [vmem:[#allocation2 + $0xc0] sm:$0xff]
      %v1126 = vld [vmem:[#allocation2 + $0xc8] sm:$0xff]
      %v1127 = vld [vmem:[#allocation2 + $0xd0] sm:$0xff]
      %v1128 = vld [vmem:[#allocation2 + $0xd8] sm:$0xff]
      %v1129 = vld [vmem:[#allocation2 + $0xe0] sm:$0xff]
      %v1130 = vld [vmem:[#allocation2 + $0xe8] sm:$0xff]
      %v1131 = vld [vmem:[#allocation2 + $0xf0] sm:$0xff]
      %v1132 = vld [vmem:[#allocation2 + $0xf8] sm:$0xff]
      %v1133 = vld [vmem:[#allocation2 + $0x100] sm:$0xff]
      %v1134 = vld [vmem:[#allocation2 + $0x108] sm:$0xff]
      %v1135 = vld [vmem:[#allocation2 + $0x110] sm:$0xff]
      %v1136 = vld [vmem:[#allocation2 + $0x118] sm:$0xff]
      %v1137 = vld [vmem:[#allocation2 + $0x120] sm:$0xff]
      %v1138 = vld [vmem:[#allocation2 + $0x128] sm:$0xff]
      %v1139 = vld [vmem:[#allocation2 + $0x130] sm:$0xff]
      %v1140 = vld [vmem:[#allocation2 + $0x138] sm:$0xff]
      %v1141 = vld [vmem:[#allocation2 + $0x140] sm:$0xff]
      %v1142 = vld [vmem:[#allocation2 + $0x148] sm:$0xff]
      %v1143 = vld [vmem:[#allocation2 + $0x150] sm:$0xff]
      %v1144 = vld [vmem:[#allocation2 + $0x158] sm:$0xff]
      %v1145 = vld [vmem:[#allocation2 + $0x160] sm:$0xff]
      %v1146 = vld [vmem:[#allocation2 + $0x168] sm:$0xff]
      %v1147 = vld [vmem:[#allocation2 + $0x170] sm:$0xff]
      %v1148 = vld [vmem:[#allocation2 + $0x178] sm:$0xff]
      %v1149 = vld [vmem:[#allocation2 + $0x180] sm:$0xff]
      %v1150 = vld [vmem:[#allocation2 + $0x188] sm:$0xff]
      %v1151 = vld [vmem:[#allocation2 + $0x190] sm:$0xff]
      %v1152 = vld [vmem:[#allocation2 + $0x198] sm:$0xff]
      %v1153 = vld [vmem:[#allocation2 + $0x1a0] sm:$0xff]
      %v1154 = vld [vmem:[#allocation2 + $0x1a8] sm:$0xff]
      %v1155 = vld [vmem:[#allocation2 + $0x1b0] sm:$0xff]
      %v1156 = vld [vmem:[#allocation2 + $0x1b8] sm:$0xff]
      %v1157 = vld [vmem:[#allocation2 + $0x1c0] sm:$0xff]
      %v1158 = vld [vmem:[#allocation2 + $0x1c8] sm:$0xff]
      %v1159 = vld [vmem:[#allocation2 + $0x1d0] sm:$0xff]
      %v1160 = vld [vmem:[#allocation2 + $0x1d8] sm:$0xff]
      %v1161 = vld [vmem:[#allocation2 + $0x1e0] sm:$0xff]
      %v1162 = vld [vmem:[#allocation2 + $0x1e8] sm:$0xff]
      %v1163 = vld [vmem:[#allocation2 + $0x1f0] sm:$0xff]
      %v1164 = vld [vmem:[#allocation2 + $0x1f8] sm:$0xff]
      %v1165 = vpack.c.bf16 %v1102, %v1101
      %v1166 = vpack.c.bf16 %v1104, %v1103
      %v1167 = vpack.c.bf16 %v1106, %v1105
      %v1168 = vpack.c.bf16 %v1108, %v1107
      %v1169 = vpack.c.bf16 %v1110, %v1109
      %v1170 = vpack.c.bf16 %v1112, %v1111
      %v1171 = vpack.c.bf16 %v1114, %v1113
      %v1172 = vpack.c.bf16 %v1116, %v1115
      %v1173 = vpack.c.bf16 %v1118, %v1117
      %v1174 = vpack.c.bf16 %v1120, %v1119
      %v1175 = vpack.c.bf16 %v1122, %v1121
      %v1176 = vpack.c.bf16 %v1124, %v1123
      %v1177 = vpack.c.bf16 %v1126, %v1125
      %v1178 = vpack.c.bf16 %v1128, %v1127
      %v1179 = vpack.c.bf16 %v1130, %v1129
      %v1180 = vpack.c.bf16 %v1132, %v1131
      %v1181 = vpack.c.bf16 %v1134, %v1133
      %v1182 = vpack.c.bf16 %v1136, %v1135
      %v1183 = vpack.c.bf16 %v1138, %v1137
      %v1184 = vpack.c.bf16 %v1140, %v1139
      %v1185 = vpack.c.bf16 %v1142, %v1141
      %v1186 = vpack.c.bf16 %v1144, %v1143
      %v1187 = vpack.c.bf16 %v1146, %v1145
      %v1188 = vpack.c.bf16 %v1148, %v1147
      %v1189 = vpack.c.bf16 %v1150, %v1149
      %v1190 = vpack.c.bf16 %v1152, %v1151
      %v1191 = vpack.c.bf16 %v1154, %v1153
      %v1192 = vpack.c.bf16 %v1156, %v1155
      %v1193 = vpack.c.bf16 %v1158, %v1157
      %v1194 = vpack.c.bf16 %v1160, %v1159
      %v1195 = vpack.c.bf16 %v1162, %v1161
      %v1196 = vpack.c.bf16 %v1164, %v1163
      %v1229 = vunpack.c.l.b16 %v1165
      %v1230 = vunpack.c.h.b16 %v1165
      %v1231 = vunpack.c.l.b16 %v1166
      %v1232 = vunpack.c.h.b16 %v1166
      %v1233 = vunpack.c.l.b16 %v1167
      %v1234 = vunpack.c.h.b16 %v1167
      %v1235 = vunpack.c.l.b16 %v1168
      %v1236 = vunpack.c.h.b16 %v1168
      %v1237 = vunpack.c.l.b16 %v1169
      %v1238 = vunpack.c.h.b16 %v1169
      %v1239 = vunpack.c.l.b16 %v1170
      %v1240 = vunpack.c.h.b16 %v1170
      %v1241 = vunpack.c.l.b16 %v1171
      %v1242 = vunpack.c.h.b16 %v1171
      %v1243 = vunpack.c.l.b16 %v1172
      %v1244 = vunpack.c.h.b16 %v1172
      %v1245 = vunpack.c.l.b16 %v1173
      %v1246 = vunpack.c.h.b16 %v1173
      %v1247 = vunpack.c.l.b16 %v1174
      %v1248 = vunpack.c.h.b16 %v1174
      %v1249 = vunpack.c.l.b16 %v1175
      %v1250 = vunpack.c.h.b16 %v1175
      %v1251 = vunpack.c.l.b16 %v1176
      %v1252 = vunpack.c.h.b16 %v1176
      %v1253 = vunpack.c.l.b16 %v1177
      %v1254 = vunpack.c.h.b16 %v1177
      %v1255 = vunpack.c.l.b16 %v1178
      %v1256 = vunpack.c.h.b16 %v1178
      %v1257 = vunpack.c.l.b16 %v1179
      %v1258 = vunpack.c.h.b16 %v1179
      %v1259 = vunpack.c.l.b16 %v1180
      %v1260 = vunpack.c.h.b16 %v1180
      %v1261 = vunpack.c.l.b16 %v1181
      %v1262 = vunpack.c.h.b16 %v1181
      %v1263 = vunpack.c.l.b16 %v1182
      %v1264 = vunpack.c.h.b16 %v1182
      %v1265 = vunpack.c.l.b16 %v1183
      %v1266 = vunpack.c.h.b16 %v1183
      %v1267 = vunpack.c.l.b16 %v1184
      %v1268 = vunpack.c.h.b16 %v1184
      %v1269 = vunpack.c.l.b16 %v1185
      %v1270 = vunpack.c.h.b16 %v1185
      %v1271 = vunpack.c.l.b16 %v1186
      %v1272 = vunpack.c.h.b16 %v1186
      %v1273 = vunpack.c.l.b16 %v1187
      %v1274 = vunpack.c.h.b16 %v1187
      %v1275 = vunpack.c.l.b16 %v1188
      %v1276 = vunpack.c.h.b16 %v1188
      %v1277 = vunpack.c.l.b16 %v1189
      %v1278 = vunpack.c.h.b16 %v1189
      %v1279 = vunpack.c.l.b16 %v1190
      %v1280 = vunpack.c.h.b16 %v1190
      %v1281 = vunpack.c.l.b16 %v1191
      %v1282 = vunpack.c.h.b16 %v1191
      %v1283 = vunpack.c.l.b16 %v1192
      %v1284 = vunpack.c.h.b16 %v1192
      %v1285 = vunpack.c.l.b16 %v1193
      %v1286 = vunpack.c.h.b16 %v1193
      %v1287 = vunpack.c.l.b16 %v1194
      %v1288 = vunpack.c.h.b16 %v1194
      %v1289 = vunpack.c.l.b16 %v1195
      %v1290 = vunpack.c.h.b16 %v1195
      %v1291 = vunpack.c.l.b16 %v1196
      %v1292 = vunpack.c.h.b16 %v1196
      %v1293 = vpack.c.b16 %v1229, %v1229
      %v1294 = vpack.c.b16 %v1230, %v1230
      %v1295 = vpack.c.b16 %v1231, %v1231
      %v1296 = vpack.c.b16 %v1232, %v1232
      %v1297 = vpack.c.b16 %v1233, %v1233
      %v1298 = vpack.c.b16 %v1234, %v1234
      %v1299 = vpack.c.b16 %v1235, %v1235
      %v1300 = vpack.c.b16 %v1236, %v1236
      %v1301 = vpack.c.b16 %v1237, %v1237
      %v1302 = vpack.c.b16 %v1238, %v1238
      %v1303 = vpack.c.b16 %v1239, %v1239
      %v1304 = vpack.c.b16 %v1240, %v1240
      %v1305 = vpack.c.b16 %v1241, %v1241
      %v1306 = vpack.c.b16 %v1242, %v1242
      %v1307 = vpack.c.b16 %v1243, %v1243
      %v1308 = vpack.c.b16 %v1244, %v1244
      %v1309 = vpack.c.b16 %v1245, %v1245
      %v1310 = vpack.c.b16 %v1246, %v1246
      %v1311 = vpack.c.b16 %v1247, %v1247
      %v1312 = vpack.c.b16 %v1248, %v1248
      %v1313 = vpack.c.b16 %v1249, %v1249
      %v1314 = vpack.c.b16 %v1250, %v1250
      %v1315 = vpack.c.b16 %v1251, %v1251
      %v1316 = vpack.c.b16 %v1252, %v1252
      %v1317 = vpack.c.b16 %v1253, %v1253
      %v1318 = vpack.c.b16 %v1254, %v1254
      %v1319 = vpack.c.b16 %v1255, %v1255
      %v1320 = vpack.c.b16 %v1256, %v1256
      %v1321 = vpack.c.b16 %v1257, %v1257
      %v1322 = vpack.c.b16 %v1258, %v1258
      %v1323 = vpack.c.b16 %v1259, %v1259
      %v1324 = vpack.c.b16 %v1260, %v1260
      %v1325 = vpack.c.b16 %v1261, %v1261
      %v1326 = vpack.c.b16 %v1262, %v1262
      %v1327 = vpack.c.b16 %v1263, %v1263
      %v1328 = vpack.c.b16 %v1264, %v1264
      %v1329 = vpack.c.b16 %v1265, %v1265
      %v1330 = vpack.c.b16 %v1266, %v1266
      %v1331 = vpack.c.b16 %v1267, %v1267
      %v1332 = vpack.c.b16 %v1268, %v1268
      %v1333 = vpack.c.b16 %v1269, %v1269
      %v1334 = vpack.c.b16 %v1270, %v1270
      %v1335 = vpack.c.b16 %v1271, %v1271
      %v1336 = vpack.c.b16 %v1272, %v1272
      %v1337 = vpack.c.b16 %v1273, %v1273
      %v1338 = vpack.c.b16 %v1274, %v1274
      %v1339 = vpack.c.b16 %v1275, %v1275
      %v1340 = vpack.c.b16 %v1276, %v1276
      %v1341 = vpack.c.b16 %v1277, %v1277
      %v1342 = vpack.c.b16 %v1278, %v1278
      %v1343 = vpack.c.b16 %v1279, %v1279
      %v1344 = vpack.c.b16 %v1280, %v1280
      %v1345 = vpack.c.b16 %v1281, %v1281
      %v1346 = vpack.c.b16 %v1282, %v1282
      %v1347 = vpack.c.b16 %v1283, %v1283
      %v1348 = vpack.c.b16 %v1284, %v1284
      %v1349 = vpack.c.b16 %v1285, %v1285
      %v1350 = vpack.c.b16 %v1286, %v1286
      %v1351 = vpack.c.b16 %v1287, %v1287
      %v1352 = vpack.c.b16 %v1288, %v1288
      %v1353 = vpack.c.b16 %v1289, %v1289
      %v1354 = vpack.c.b16 %v1290, %v1290
      %v1355 = vpack.c.b16 %v1291, %v1291
      %v1356 = vpack.c.b16 %v1292, %v1292
      %vm1421 = vcmask 519168
      %1422 = vst.msk [vmem:[%s2] sm:$0xf] %vm1421, %v1293
      %1423 = vst.msk [vmem:[%s2 + $0x4] sm:$0xf] %vm1421, %v1294
      %1424 = vst.msk [vmem:[%s2 + $0x8] sm:$0xf] %vm1421, %v1295
      %1425 = vst.msk [vmem:[%s2 + $0xc] sm:$0xf] %vm1421, %v1296
      %1426 = vst.msk [vmem:[%s2 + $0x10] sm:$0xf] %vm1421, %v1297
      %1427 = vst.msk [vmem:[%s2 + $0x14] sm:$0xf] %vm1421, %v1298
      %1428 = vst.msk [vmem:[%s2 + $0x18] sm:$0xf] %vm1421, %v1299
      %1429 = vst.msk [vmem:[%s2 + $0x1c] sm:$0xf] %vm1421, %v1300
      %1430 = vst.msk [vmem:[%s2 + $0x20] sm:$0xf] %vm1421, %v1301
      %1431 = vst.msk [vmem:[%s2 + $0x24] sm:$0xf] %vm1421, %v1302
      %1432 = vst.msk [vmem:[%s2 + $0x28] sm:$0xf] %vm1421, %v1303
      %1433 = vst.msk [vmem:[%s2 + $0x2c] sm:$0xf] %vm1421, %v1304
      %1434 = vst.msk [vmem:[%s2 + $0x30] sm:$0xf] %vm1421, %v1305
      %1435 = vst.msk [vmem:[%s2 + $0x34] sm:$0xf] %vm1421, %v1306
      %1436 = vst.msk [vmem:[%s2 + $0x38] sm:$0xf] %vm1421, %v1307
      %1437 = vst.msk [vmem:[%s2 + $0x3c] sm:$0xf] %vm1421, %v1308
      %1438 = vst.msk [vmem:[%s2 + $0x40] sm:$0xf] %vm1421, %v1309
      %1439 = vst.msk [vmem:[%s2 + $0x44] sm:$0xf] %vm1421, %v1310
      %1440 = vst.msk [vmem:[%s2 + $0x48] sm:$0xf] %vm1421, %v1311
      %1441 = vst.msk [vmem:[%s2 + $0x4c] sm:$0xf] %vm1421, %v1312
      %1442 = vst.msk [vmem:[%s2 + $0x50] sm:$0xf] %vm1421, %v1313
      %1443 = vst.msk [vmem:[%s2 + $0x54] sm:$0xf] %vm1421, %v1314
      %1444 = vst.msk [vmem:[%s2 + $0x58] sm:$0xf] %vm1421, %v1315
      %1445 = vst.msk [vmem:[%s2 + $0x5c] sm:$0xf] %vm1421, %v1316
      %1446 = vst.msk [vmem:[%s2 + $0x60] sm:$0xf] %vm1421, %v1317
      %1447 = vst.msk [vmem:[%s2 + $0x64] sm:$0xf] %vm1421, %v1318
      %1448 = vst.msk [vmem:[%s2 + $0x68] sm:$0xf] %vm1421, %v1319
      %1449 = vst.msk [vmem:[%s2 + $0x6c] sm:$0xf] %vm1421, %v1320
      %1450 = vst.msk [vmem:[%s2 + $0x70] sm:$0xf] %vm1421, %v1321
      %1451 = vst.msk [vmem:[%s2 + $0x74] sm:$0xf] %vm1421, %v1322
      %1452 = vst.msk [vmem:[%s2 + $0x78] sm:$0xf] %vm1421, %v1323
      %1453 = vst.msk [vmem:[%s2 + $0x7c] sm:$0xf] %vm1421, %v1324
      %1454 = vst.msk [vmem:[%s2 + $0x80] sm:$0xf] %vm1421, %v1325
      %1455 = vst.msk [vmem:[%s2 + $0x84] sm:$0xf] %vm1421, %v1326
      %1456 = vst.msk [vmem:[%s2 + $0x88] sm:$0xf] %vm1421, %v1327
      %1457 = vst.msk [vmem:[%s2 + $0x8c] sm:$0xf] %vm1421, %v1328
      %1458 = vst.msk [vmem:[%s2 + $0x90] sm:$0xf] %vm1421, %v1329
      %1459 = vst.msk [vmem:[%s2 + $0x94] sm:$0xf] %vm1421, %v1330
      %1460 = vst.msk [vmem:[%s2 + $0x98] sm:$0xf] %vm1421, %v1331
      %1461 = vst.msk [vmem:[%s2 + $0x9c] sm:$0xf] %vm1421, %v1332
      %1462 = vst.msk [vmem:[%s2 + $0xa0] sm:$0xf] %vm1421, %v1333
      %1463 = vst.msk [vmem:[%s2 + $0xa4] sm:$0xf] %vm1421, %v1334
      %1464 = vst.msk [vmem:[%s2 + $0xa8] sm:$0xf] %vm1421, %v1335
      %1465 = vst.msk [vmem:[%s2 + $0xac] sm:$0xf] %vm1421, %v1336
      %1466 = vst.msk [vmem:[%s2 + $0xb0] sm:$0xf] %vm1421, %v1337
      %1467 = vst.msk [vmem:[%s2 + $0xb4] sm:$0xf] %vm1421, %v1338
      %1468 = vst.msk [vmem:[%s2 + $0xb8] sm:$0xf] %vm1421, %v1339
      %1469 = vst.msk [vmem:[%s2 + $0xbc] sm:$0xf] %vm1421, %v1340
      %1470 = vst.msk [vmem:[%s2 + $0xc0] sm:$0xf] %vm1421, %v1341
      %1471 = vst.msk [vmem:[%s2 + $0xc4] sm:$0xf] %vm1421, %v1342
      %1472 = vst.msk [vmem:[%s2 + $0xc8] sm:$0xf] %vm1421, %v1343
      %1473 = vst.msk [vmem:[%s2 + $0xcc] sm:$0xf] %vm1421, %v1344
      %1474 = vst.msk [vmem:[%s2 + $0xd0] sm:$0xf] %vm1421, %v1345
      %1475 = vst.msk [vmem:[%s2 + $0xd4] sm:$0xf] %vm1421, %v1346
      %1476 = vst.msk [vmem:[%s2 + $0xd8] sm:$0xf] %vm1421, %v1347
      %1477 = vst.msk [vmem:[%s2 + $0xdc] sm:$0xf] %vm1421, %v1348
      %1478 = vst.msk [vmem:[%s2 + $0xe0] sm:$0xf] %vm1421, %v1349
      %1479 = vst.msk [vmem:[%s2 + $0xe4] sm:$0xf] %vm1421, %v1350
      %1480 = vst.msk [vmem:[%s2 + $0xe8] sm:$0xf] %vm1421, %v1351
      %1481 = vst.msk [vmem:[%s2 + $0xec] sm:$0xf] %vm1421, %v1352
      %1482 = vst.msk [vmem:[%s2 + $0xf0] sm:$0xf] %vm1421, %v1353
      %1483 = vst.msk [vmem:[%s2 + $0xf4] sm:$0xf] %vm1421, %v1354
      %1484 = vst.msk [vmem:[%s2 + $0xf8] sm:$0xf] %vm1421, %v1355
      %1485 = vst.msk [vmem:[%s2 + $0xfc] sm:$0xf] %vm1421, %v1356
      %v1486 = vsel %vm1033, %v1101, 0.0
      %v1487 = vsel %vm1033, %v1102, 0.0
      %v1488 = vadd.f32 %v1486, %v1487
      %v1489 = vsel %vm1033, %v1103, 0.0
      %v1490 = vadd.f32 %v1488, %v1489
      %v1491 = vsel %vm1033, %v1104, 0.0
      %v1492 = vadd.f32 %v1490, %v1491
      %v1493 = vsel %vm1033, %v1105, 0.0
      %v1494 = vadd.f32 %v1492, %v1493
      %v1495 = vsel %vm1033, %v1106, 0.0
      %v1496 = vadd.f32 %v1494, %v1495
      %v1497 = vsel %vm1033, %v1107, 0.0
      %v1498 = vadd.f32 %v1496, %v1497
      %v1499 = vsel %vm1033, %v1108, 0.0
      %v1500 = vadd.f32 %v1498, %v1499
      %v1501 = vsel %vm1033, %v1109, 0.0
      %v1502 = vadd.f32 %v1500, %v1501
      %v1503 = vsel %vm1033, %v1110, 0.0
      %v1504 = vadd.f32 %v1502, %v1503
      %v1505 = vsel %vm1033, %v1111, 0.0
      %v1506 = vadd.f32 %v1504, %v1505
      %v1507 = vsel %vm1033, %v1112, 0.0
      %v1508 = vadd.f32 %v1506, %v1507
      %v1509 = vsel %vm1033, %v1113, 0.0
      %v1510 = vadd.f32 %v1508, %v1509
      %v1511 = vsel %vm1033, %v1114, 0.0
      %v1512 = vadd.f32 %v1510, %v1511
      %v1513 = vsel %vm1033, %v1115, 0.0
      %v1514 = vadd.f32 %v1512, %v1513
      %v1515 = vsel %vm1033, %v1116, 0.0
      %v1516 = vadd.f32 %v1514, %v1515
      %v1517 = vsel %vm1033, %v1117, 0.0
      %v1518 = vadd.f32 %v1516, %v1517
      %v1519 = vsel %vm1033, %v1118, 0.0
      %v1520 = vadd.f32 %v1518, %v1519
      %v1521 = vsel %vm1033, %v1119, 0.0
      %v1522 = vadd.f32 %v1520, %v1521
      %v1523 = vsel %vm1033, %v1120, 0.0
      %v1524 = vadd.f32 %v1522, %v1523
      %v1525 = vsel %vm1033, %v1121, 0.0
      %v1526 = vadd.f32 %v1524, %v1525
      %v1527 = vsel %vm1033, %v1122, 0.0
      %v1528 = vadd.f32 %v1526, %v1527
      %v1529 = vsel %vm1033, %v1123, 0.0
      %v1530 = vadd.f32 %v1528, %v1529
      %v1531 = vsel %vm1033, %v1124, 0.0
      %v1532 = vadd.f32 %v1530, %v1531
      %v1533 = vsel %vm1033, %v1125, 0.0
      %v1534 = vadd.f32 %v1532, %v1533
      %v1535 = vsel %vm1033, %v1126, 0.0
      %v1536 = vadd.f32 %v1534, %v1535
      %v1537 = vsel %vm1033, %v1127, 0.0
      %v1538 = vadd.f32 %v1536, %v1537
      %v1539 = vsel %vm1033, %v1128, 0.0
      %v1540 = vadd.f32 %v1538, %v1539
      %v1541 = vsel %vm1033, %v1129, 0.0
      %v1542 = vadd.f32 %v1540, %v1541
      %v1543 = vsel %vm1033, %v1130, 0.0
      %v1544 = vadd.f32 %v1542, %v1543
      %v1545 = vsel %vm1033, %v1131, 0.0
      %v1546 = vadd.f32 %v1544, %v1545
      %v1547 = vsel %vm1033, %v1132, 0.0
      %v1548 = vadd.f32 %v1546, %v1547
      %v1549 = vsel %vm1033, %v1133, 0.0
      %v1550 = vadd.f32 %v1548, %v1549
      %v1551 = vsel %vm1033, %v1134, 0.0
      %v1552 = vadd.f32 %v1550, %v1551
      %v1553 = vsel %vm1033, %v1135, 0.0
      %v1554 = vadd.f32 %v1552, %v1553
      %v1555 = vsel %vm1033, %v1136, 0.0
      %v1556 = vadd.f32 %v1554, %v1555
      %v1557 = vsel %vm1033, %v1137, 0.0
      %v1558 = vadd.f32 %v1556, %v1557
      %v1559 = vsel %vm1033, %v1138, 0.0
      %v1560 = vadd.f32 %v1558, %v1559
      %v1561 = vsel %vm1033, %v1139, 0.0
      %v1562 = vadd.f32 %v1560, %v1561
      %v1563 = vsel %vm1033, %v1140, 0.0
      %v1564 = vadd.f32 %v1562, %v1563
      %v1565 = vsel %vm1033, %v1141, 0.0
      %v1566 = vadd.f32 %v1564, %v1565
      %v1567 = vsel %vm1033, %v1142, 0.0
      %v1568 = vadd.f32 %v1566, %v1567
      %v1569 = vsel %vm1033, %v1143, 0.0
      %v1570 = vadd.f32 %v1568, %v1569
      %v1571 = vsel %vm1033, %v1144, 0.0
      %v1572 = vadd.f32 %v1570, %v1571
      %v1573 = vsel %vm1033, %v1145, 0.0
      %v1574 = vadd.f32 %v1572, %v1573
      %v1575 = vsel %vm1033, %v1146, 0.0
      %v1576 = vadd.f32 %v1574, %v1575
      %v1577 = vsel %vm1033, %v1147, 0.0
      %v1578 = vadd.f32 %v1576, %v1577
      %v1579 = vsel %vm1033, %v1148, 0.0
      %v1580 = vadd.f32 %v1578, %v1579
      %v1581 = vsel %vm1033, %v1149, 0.0
      %v1582 = vadd.f32 %v1580, %v1581
      %v1583 = vsel %vm1033, %v1150, 0.0
      %v1584 = vadd.f32 %v1582, %v1583
      %v1585 = vsel %vm1033, %v1151, 0.0
      %v1586 = vadd.f32 %v1584, %v1585
      %v1587 = vsel %vm1033, %v1152, 0.0
      %v1588 = vadd.f32 %v1586, %v1587
      %v1589 = vsel %vm1033, %v1153, 0.0
      %v1590 = vadd.f32 %v1588, %v1589
      %v1591 = vsel %vm1033, %v1154, 0.0
      %v1592 = vadd.f32 %v1590, %v1591
      %v1593 = vsel %vm1033, %v1155, 0.0
      %v1594 = vadd.f32 %v1592, %v1593
      %v1595 = vsel %vm1033, %v1156, 0.0
      %v1596 = vadd.f32 %v1594, %v1595
      %v1597 = vsel %vm1033, %v1157, 0.0
      %v1598 = vadd.f32 %v1596, %v1597
      %v1599 = vsel %vm1033, %v1158, 0.0
      %v1600 = vadd.f32 %v1598, %v1599
      %v1601 = vsel %vm1033, %v1159, 0.0
      %v1602 = vadd.f32 %v1600, %v1601
      %v1603 = vsel %vm1033, %v1160, 0.0
      %v1604 = vadd.f32 %v1602, %v1603
      %v1605 = vsel %vm1033, %v1161, 0.0
      %v1606 = vadd.f32 %v1604, %v1605
      %v1607 = vsel %vm1033, %v1162, 0.0
      %v1608 = vadd.f32 %v1606, %v1607
      %v1609 = vsel %vm1033, %v1163, 0.0
      %v1610 = vadd.f32 %v1608, %v1609
      %v1611 = vsel %vm1033, %v1164, 0.0
      %v1612 = vadd.f32 %v1610, %v1611
      %v1613 = vrot.slane %v1612, 4
      %v1614 = vadd.f32 %v1612, %v1613
      %v1615 = vrot.slane %v1614, 2
      %v1616 = vadd.f32 %v1614, %v1615
      %v1617 = vrot.slane %v1616, 1
      %v1618 = vadd.f32 %v1616, %v1617
      %v1619 = vmul.f32 %v1101, %v1101
      %v1620 = vmul.f32 %v1102, %v1102
      %v1621 = vmul.f32 %v1103, %v1103
      %v1622 = vmul.f32 %v1104, %v1104
      %v1623 = vmul.f32 %v1105, %v1105
      %v1624 = vmul.f32 %v1106, %v1106
      %v1625 = vmul.f32 %v1107, %v1107
      %v1626 = vmul.f32 %v1108, %v1108
      %v1627 = vmul.f32 %v1109, %v1109
      %v1628 = vmul.f32 %v1110, %v1110
      %v1629 = vmul.f32 %v1111, %v1111
      %v1630 = vmul.f32 %v1112, %v1112
      %v1631 = vmul.f32 %v1113, %v1113
      %v1632 = vmul.f32 %v1114, %v1114
      %v1633 = vmul.f32 %v1115, %v1115
      %v1634 = vmul.f32 %v1116, %v1116
      %v1635 = vmul.f32 %v1117, %v1117
      %v1636 = vmul.f32 %v1118, %v1118
      %v1637 = vmul.f32 %v1119, %v1119
      %v1638 = vmul.f32 %v1120, %v1120
      %v1639 = vmul.f32 %v1121, %v1121
      %v1640 = vmul.f32 %v1122, %v1122
      %v1641 = vmul.f32 %v1123, %v1123
      %v1642 = vmul.f32 %v1124, %v1124
      %v1643 = vmul.f32 %v1125, %v1125
      %v1644 = vmul.f32 %v1126, %v1126
      %v1645 = vmul.f32 %v1127, %v1127
      %v1646 = vmul.f32 %v1128, %v1128
      %v1647 = vmul.f32 %v1129, %v1129
      %v1648 = vmul.f32 %v1130, %v1130
      %v1649 = vmul.f32 %v1131, %v1131
      %v1650 = vmul.f32 %v1132, %v1132
      %v1651 = vmul.f32 %v1133, %v1133
      %v1652 = vmul.f32 %v1134, %v1134
      %v1653 = vmul.f32 %v1135, %v1135
      %v1654 = vmul.f32 %v1136, %v1136
      %v1655 = vmul.f32 %v1137, %v1137
      %v1656 = vmul.f32 %v1138, %v1138
      %v1657 = vmul.f32 %v1139, %v1139
      %v1658 = vmul.f32 %v1140, %v1140
      %v1659 = vmul.f32 %v1141, %v1141
      %v1660 = vmul.f32 %v1142, %v1142
      %v1661 = vmul.f32 %v1143, %v1143
      %v1662 = vmul.f32 %v1144, %v1144
      %v1663 = vmul.f32 %v1145, %v1145
      %v1664 = vmul.f32 %v1146, %v1146
      %v1665 = vmul.f32 %v1147, %v1147
      %v1666 = vmul.f32 %v1148, %v1148
      %v1667 = vmul.f32 %v1149, %v1149
      %v1668 = vmul.f32 %v1150, %v1150
      %v1669 = vmul.f32 %v1151, %v1151
      %v1670 = vmul.f32 %v1152, %v1152
      %v1671 = vmul.f32 %v1153, %v1153
      %v1672 = vmul.f32 %v1154, %v1154
      %v1673 = vmul.f32 %v1155, %v1155
      %v1674 = vmul.f32 %v1156, %v1156
      %v1675 = vmul.f32 %v1157, %v1157
      %v1676 = vmul.f32 %v1158, %v1158
      %v1677 = vmul.f32 %v1159, %v1159
      %v1678 = vmul.f32 %v1160, %v1160
      %v1679 = vmul.f32 %v1161, %v1161
      %v1680 = vmul.f32 %v1162, %v1162
      %v1681 = vmul.f32 %v1163, %v1163
      %v1682 = vmul.f32 %v1164, %v1164
      %v1683 = vsel %vm1033, %v1619, 0.0
      %v1684 = vsel %vm1033, %v1620, 0.0
      %v1685 = vadd.f32 %v1683, %v1684
      %v1686 = vsel %vm1033, %v1621, 0.0
      %v1687 = vadd.f32 %v1685, %v1686
      %v1688 = vsel %vm1033, %v1622, 0.0
      %v1689 = vadd.f32 %v1687, %v1688
      %v1690 = vsel %vm1033, %v1623, 0.0
      %v1691 = vadd.f32 %v1689, %v1690
      %v1692 = vsel %vm1033, %v1624, 0.0
      %v1693 = vadd.f32 %v1691, %v1692
      %v1694 = vsel %vm1033, %v1625, 0.0
      %v1695 = vadd.f32 %v1693, %v1694
      %v1696 = vsel %vm1033, %v1626, 0.0
      %v1697 = vadd.f32 %v1695, %v1696
      %v1698 = vsel %vm1033, %v1627, 0.0
      %v1699 = vadd.f32 %v1697, %v1698
      %v1700 = vsel %vm1033, %v1628, 0.0
      %v1701 = vadd.f32 %v1699, %v1700
      %v1702 = vsel %vm1033, %v1629, 0.0
      %v1703 = vadd.f32 %v1701, %v1702
      %v1704 = vsel %vm1033, %v1630, 0.0
      %v1705 = vadd.f32 %v1703, %v1704
      %v1706 = vsel %vm1033, %v1631, 0.0
      %v1707 = vadd.f32 %v1705, %v1706
      %v1708 = vsel %vm1033, %v1632, 0.0
      %v1709 = vadd.f32 %v1707, %v1708
      %v1710 = vsel %vm1033, %v1633, 0.0
      %v1711 = vadd.f32 %v1709, %v1710
      %v1712 = vsel %vm1033, %v1634, 0.0
      %v1713 = vadd.f32 %v1711, %v1712
      %v1714 = vsel %vm1033, %v1635, 0.0
      %v1715 = vadd.f32 %v1713, %v1714
      %v1716 = vsel %vm1033, %v1636, 0.0
      %v1717 = vadd.f32 %v1715, %v1716
      %v1718 = vsel %vm1033, %v1637, 0.0
      %v1719 = vadd.f32 %v1717, %v1718
      %v1720 = vsel %vm1033, %v1638, 0.0
      %v1721 = vadd.f32 %v1719, %v1720
      %v1722 = vsel %vm1033, %v1639, 0.0
      %v1723 = vadd.f32 %v1721, %v1722
      %v1724 = vsel %vm1033, %v1640, 0.0
      %v1725 = vadd.f32 %v1723, %v1724
      %v1726 = vsel %vm1033, %v1641, 0.0
      %v1727 = vadd.f32 %v1725, %v1726
      %v1728 = vsel %vm1033, %v1642, 0.0
      %v1729 = vadd.f32 %v1727, %v1728
      %v1730 = vsel %vm1033, %v1643, 0.0
      %v1731 = vadd.f32 %v1729, %v1730
      %v1732 = vsel %vm1033, %v1644, 0.0
      %v1733 = vadd.f32 %v1731, %v1732
      %v1734 = vsel %vm1033, %v1645, 0.0
      %v1735 = vadd.f32 %v1733, %v1734
      %v1736 = vsel %vm1033, %v1646, 0.0
      %v1737 = vadd.f32 %v1735, %v1736
      %v1738 = vsel %vm1033, %v1647, 0.0
      %v1739 = vadd.f32 %v1737, %v1738
      %v1740 = vsel %vm1033, %v1648, 0.0
      %v1741 = vadd.f32 %v1739, %v1740
      %v1742 = vsel %vm1033, %v1649, 0.0
      %v1743 = vadd.f32 %v1741, %v1742
      %v1744 = vsel %vm1033, %v1650, 0.0
      %v1745 = vadd.f32 %v1743, %v1744
      %v1746 = vsel %vm1033, %v1651, 0.0
      %v1747 = vadd.f32 %v1745, %v1746
      %v1748 = vsel %vm1033, %v1652, 0.0
      %v1749 = vadd.f32 %v1747, %v1748
      %v1750 = vsel %vm1033, %v1653, 0.0
      %v1751 = vadd.f32 %v1749, %v1750
      %v1752 = vsel %vm1033, %v1654, 0.0
      %v1753 = vadd.f32 %v1751, %v1752
      %v1754 = vsel %vm1033, %v1655, 0.0
      %v1755 = vadd.f32 %v1753, %v1754
      %v1756 = vsel %vm1033, %v1656, 0.0
      %v1757 = vadd.f32 %v1755, %v1756
      %v1758 = vsel %vm1033, %v1657, 0.0
      %v1759 = vadd.f32 %v1757, %v1758
      %v1760 = vsel %vm1033, %v1658, 0.0
      %v1761 = vadd.f32 %v1759, %v1760
      %v1762 = vsel %vm1033, %v1659, 0.0
      %v1763 = vadd.f32 %v1761, %v1762
      %v1764 = vsel %vm1033, %v1660, 0.0
      %v1765 = vadd.f32 %v1763, %v1764
      %v1766 = vsel %vm1033, %v1661, 0.0
      %v1767 = vadd.f32 %v1765, %v1766
      %v1768 = vsel %vm1033, %v1662, 0.0
      %v1769 = vadd.f32 %v1767, %v1768
      %v1770 = vsel %vm1033, %v1663, 0.0
      %v1771 = vadd.f32 %v1769, %v1770
      %v1772 = vsel %vm1033, %v1664, 0.0
      %v1773 = vadd.f32 %v1771, %v1772
      %v1774 = vsel %vm1033, %v1665, 0.0
      %v1775 = vadd.f32 %v1773, %v1774
      %v1776 = vsel %vm1033, %v1666, 0.0
      %v1777 = vadd.f32 %v1775, %v1776
      %v1778 = vsel %vm1033, %v1667, 0.0
      %v1779 = vadd.f32 %v1777, %v1778
      %v1780 = vsel %vm1033, %v1668, 0.0
      %v1781 = vadd.f32 %v1779, %v1780
      %v1782 = vsel %vm1033, %v1669, 0.0
      %v1783 = vadd.f32 %v1781, %v1782
      %v1784 = vsel %vm1033, %v1670, 0.0
      %v1785 = vadd.f32 %v1783, %v1784
      %v1786 = vsel %vm1033, %v1671, 0.0
      %v1787 = vadd.f32 %v1785, %v1786
      %v1788 = vsel %vm1033, %v1672, 0.0
      %v1789 = vadd.f32 %v1787, %v1788
      %v1790 = vsel %vm1033, %v1673, 0.0
      %v1791 = vadd.f32 %v1789, %v1790
      %v1792 = vsel %vm1033, %v1674, 0.0
      %v1793 = vadd.f32 %v1791, %v1792
      %v1794 = vsel %vm1033, %v1675, 0.0
      %v1795 = vadd.f32 %v1793, %v1794
      %v1796 = vsel %vm1033, %v1676, 0.0
      %v1797 = vadd.f32 %v1795, %v1796
      %v1798 = vsel %vm1033, %v1677, 0.0
      %v1799 = vadd.f32 %v1797, %v1798
      %v1800 = vsel %vm1033, %v1678, 0.0
      %v1801 = vadd.f32 %v1799, %v1800
      %v1802 = vsel %vm1033, %v1679, 0.0
      %v1803 = vadd.f32 %v1801, %v1802
      %v1804 = vsel %vm1033, %v1680, 0.0
      %v1805 = vadd.f32 %v1803, %v1804
      %v1806 = vsel %vm1033, %v1681, 0.0
      %v1807 = vadd.f32 %v1805, %v1806
      %v1808 = vsel %vm1033, %v1682, 0.0
      %v1809 = vadd.f32 %v1807, %v1808
      %v1810 = vrot.slane %v1809, 4
      %v1811 = vadd.f32 %v1809, %v1810
      %v1812 = vrot.slane %v1811, 2
      %v1813 = vadd.f32 %v1811, %v1812
      %v1814 = vrot.slane %v1813, 1
      %v1815 = vadd.f32 %v1813, %v1814
      %v1816 = vsel %vm673, %v1618, %v1815
      %vm1817 = vcmask 517120
      %1818 = vst.msk [vmem:[#allocation3] sm:$0x3] %vm1817, %v1816
    $region17: #{tpu_custom_call.1} parent=1 // pred_fallthru
      _
    // Predicated region
    $region18: #{tpu_custom_call.1} parent=1 // pred_check
      _
    $region19: #{tpu_custom_call.1} parent=1 // pred_check_branch
      %1820 = sbr.rel (0) target = $region21
    $region20: #{tpu_custom_call.1} parent=1 // pred_region
      _
    $region21: #{tpu_custom_call.1} parent=1 // pred_fallthru
      _
    // Predicated region
    $region22: #{tpu_custom_call.1} parent=1 // pred_check
      _
    $region23: #{tpu_custom_call.1} parent=1 // pred_check_branch
      %1822 = sbr.rel (0) target = $region25
    $region24: #{tpu_custom_call.1} parent=1 // pred_region
      %s1824 = ssub.s32 32, 32
      %1825 = vsyncadd [#allocation4], %s1824
      %s1827 = sshll.u32 [#allocation3], 4
      %s1828 = int_to_ptr.vmem [resolvable:$true] %s1827
      %1830 = dma.vmem_to_hbm [thread:$0]  %s1828, 32, %s3, [#allocation4]
    $region25: #{tpu_custom_call.1} parent=1 // pred_fallthru
      _
    // Predicated region
    $region26: #{tpu_custom_call.1} parent=1 // pred_check
      _
    $region27: #{tpu_custom_call.1} parent=1 // pred_check_branch
      %1832 = sbr.rel (0) target = $region29
    $region28: #{tpu_custom_call.1} parent=1 // pred_region
      _
    $region29: #{tpu_custom_call.1} parent=1 // pred_fallthru
      _
    // Predicated region
    $region30: #{tpu_custom_call.1} parent=1 // pred_check
      _
    $region31: #{tpu_custom_call.1} parent=1 // pred_check_branch
      %1834 = sbr.rel (0) target = $region33
    $region32: #{tpu_custom_call.1} parent=1 // pred_region
      %1835 = dma.done [#allocation4], 32
    $region33: #{tpu_custom_call.1} parent=1 // pred_fallthru
      _
    %1836 = vsyncpa [#allocation4], 1

</llo_original>
